<compile_context>
chip_gen: v6e
topology: v6e:2x2x1
jax: 0.10.0
libtpu: 0.0.40
codegen_flags: <defaults>
</compile_context>

<pallas_src>
import functools

import jax
import jax.numpy as jnp
from jax import lax
from jax.experimental import pallas as pl
from jax.experimental.pallas import tpu as pltpu

EPS = 1e-5                      # nn.LayerNorm default eps
_MAX_ROW_TILE = 256             # row tile cap (multiple of 8 for f32 sublanes)
_GELU_C = 0.7978845608028654    # sqrt(2/pi)


def _round_up(x, m):
    return (x + m - 1) // m * m


def _layernorm_f32(x, g_ref, b_ref):
    """LayerNorm over the last axis (biased variance, eps=1e-5), f32 math."""
    mean = jnp.mean(x, axis=-1, keepdims=True)
    c = x - mean
    var = jnp.mean(c * c, axis=-1, keepdims=True)
    y = c * lax.rsqrt(var + EPS)
    return y * g_ref[...].astype(jnp.float32) + b_ref[...].astype(jnp.float32)


def _ln_matmul_kernel(x_ref, g_ref, b_ref, w_ref, o_ref):
    """(TR, D) rows -> LayerNorm -> @ (D, DO) weight -> (TR, DO). No bias."""
    y = _layernorm_f32(x_ref[...].astype(jnp.float32), g_ref, b_ref)
    out = jnp.dot(y.astype(w_ref.dtype), w_ref[...],
                  preferred_element_type=jnp.float32)
    o_ref[...] = out.astype(o_ref.dtype)


def _matmul_bias_residual_kernel(x_ref, res_ref, w_ref, b_ref, o_ref):
    """(TR, D) @ (D, DO) + bias + residual add."""
    out = jnp.dot(x_ref[...].astype(w_ref.dtype), w_ref[...],
                  preferred_element_type=jnp.float32)
    out = out + b_ref[...].astype(jnp.float32) + res_ref[...].astype(jnp.float32)
    o_ref[...] = out.astype(o_ref.dtype)


def _prenorm_ff_kernel(x_ref, g_ref, b_ref, w1_ref, b1_ref, w2_ref, b2_ref, o_ref):
    """Residual(PreNorm(FeedForward)) fused on a row tile."""
    x = x_ref[...].astype(jnp.float32)
    y = _layernorm_f32(x, g_ref, b_ref)
    h = jnp.dot(y.astype(w1_ref.dtype), w1_ref[...],
                preferred_element_type=jnp.float32)
    h = h + b1_ref[...].astype(jnp.float32)
    # TODO(synk): nn.GELU() default is the exact erf GELU; using the tanh
    # approximation here to stay on guaranteed Pallas/Mosaic elementwise ops.
    h = 0.5 * h * (1.0 + jnp.tanh(_GELU_C * (h + 0.044715 * h * h * h)))
    out = jnp.dot(h.astype(w2_ref.dtype), w2_ref[...],
                  preferred_element_type=jnp.float32)
    out = out + b2_ref[...].astype(jnp.float32) + x    # residual
    o_ref[...] = out.astype(o_ref.dtype)


def _attention_kernel(q_ref, k_ref, v_ref, o_ref, *, scale):
    """softmax(q k^T * scale) v for one (batch, head) block of shape (1, N, hd)."""
    s = jnp.einsum("bqd,bkd->bqk",
                   q_ref[...].astype(jnp.float32),
                   k_ref[...].astype(jnp.float32),
                   preferred_element_type=jnp.float32) * scale
    s = s - jnp.max(s, axis=-1, keepdims=True)
    p = jnp.exp(s)
    p = p / jnp.sum(p, axis=-1, keepdims=True)
    # TODO(synk): attention dropout (p=attn_dropout_rate) omitted (eval mode).
    out = jnp.einsum("bqk,bkd->bqd", p.astype(v_ref.dtype), v_ref[...],
                     preferred_element_type=jnp.float32)
    o_ref[...] = out.astype(o_ref.dtype)


def _call_row_tiled(kernel, row_inputs, const_inputs, out_cols, out_dtype):
    """Run `kernel` over (rows, C) inputs, tiled along the row axis.

    row_inputs are tiled TR rows per grid step (double-buffered pipeline);
    const_inputs (weights / affine params) use constant index maps so they
    stay resident in VMEM across the whole grid.
    """
    rows = row_inputs[0].shape[0]
    tr = min(_MAX_ROW_TILE, _round_up(rows, 8))
    rows_p = _round_up(rows, tr)
    if rows_p != rows:
        # Zero padding is safe through LayerNorm (eps > 0) and the matmuls;
        # padded rows are sliced off afterwards.
        row_inputs = [jnp.pad(a, ((0, rows_p - rows), (0, 0))) for a in row_inputs]

    in_specs = [pl.BlockSpec((tr, a.shape[1]), lambda i: (i, 0)) for a in row_inputs]
    in_specs += [pl.BlockSpec(c.shape, lambda i: (0, 0)) for c in const_inputs]

    out = pl.pallas_call(
        kernel,
        out_shape=jax.ShapeDtypeStruct((rows_p, out_cols), out_dtype),
        grid_spec=pltpu.PrefetchScalarGridSpec(
            num_scalar_prefetch=0,
            grid=(rows_p // tr,),
            in_specs=in_specs,
            out_specs=pl.BlockSpec((tr, out_cols), lambda i: (i, 0)),
        ),
        compiler_params=pltpu.CompilerParams(
            dimension_semantics=("parallel",)),
    )(*row_inputs, *const_inputs)
    return out[:rows] if rows_p != rows else out


def _attention(q, k, v, scale):
    """q, k, v: (B*H, N, hd) -> attended values (B*H, N, hd)."""
    bh, n, hd = q.shape
    kernel = functools.partial(_attention_kernel, scale=scale)
    return pl.pallas_call(
        kernel,
        out_shape=jax.ShapeDtypeStruct((bh, n, hd), q.dtype),
        grid_spec=pltpu.PrefetchScalarGridSpec(
            num_scalar_prefetch=0,
            grid=(bh,),
            in_specs=[pl.BlockSpec((1, n, hd), lambda i: (i, 0, 0))] * 3,
            out_specs=pl.BlockSpec((1, n, hd), lambda i: (i, 0, 0)),
        ),
        compiler_params=pltpu.CompilerParams(
            dimension_semantics=("parallel",)),
    )(q, k, v)


@functools.partial(jax.jit, static_argnames=("heads",))
def transformer_forward(x, params, heads):
    """x: (B, N, D).  params: list of per-layer dicts (weights stored (in, out))."""
    B, N, D = x.shape
    H = heads
    hd = D // H
    scale = float(hd) ** -0.5
    rows = B * N

    out = x
    for p in params:
        x2 = out.reshape(rows, D)

        # --- Residual(PreNormDrop(SelfAttention)) ---------------------------
        # TODO(synk): nn.Dropout(p=dropout_rate) omitted (eval-mode identity).
        qkv = _call_row_tiled(
            _ln_matmul_kernel,
            [x2],
            [p["ln1_g"].reshape(1, D), p["ln1_b"].reshape(1, D), p["w_qkv"]],
            3 * D, x2.dtype)
        qkv = qkv.reshape(B, N, 3, H, hd).transpose(2, 0, 3, 1, 4)   # (3,B,H,N,hd)
        q = qkv[0].reshape(B * H, N, hd)
        k = qkv[1].reshape(B * H, N, hd)
        v = qkv[2].reshape(B * H, N, hd)

        attn = _attention(q, k, v, scale)                            # (B*H,N,hd)
        attn = attn.reshape(B, H, N, hd).transpose(0, 2, 1, 3).reshape(rows, D)

        x2 = _call_row_tiled(
            _matmul_bias_residual_kernel,
            [attn, x2],
            [p["w_proj"], p["b_proj"].reshape(1, D)],
            D, x2.dtype)

        # --- Residual(PreNorm(FeedForward)) ---------------------------------
        x2 = _call_row_tiled(
            _prenorm_ff_kernel,
            [x2],
            [p["ln2_g"].reshape(1, D), p["ln2_b"].reshape(1, D),
             p["w1"], p["b1"].reshape(1, -1),
             p["w2"], p["b2"].reshape(1, D)],
            D, x2.dtype)

        out = x2.reshape(B, N, D)
    return out


# ------------------------------- reference ---------------------------------

def _reference(x, params, heads):
    B, N, D = x.shape
    H = heads
    hd = D // H
    scale = float(hd) ** -0.5

    def ln(z, g, b):
        m = z.mean(-1, keepdims=True)
        v = ((z - m) ** 2).mean(-1, keepdims=True)
        return (z - m) / jnp.sqrt(v + EPS) * g + b

    out = x.astype(jnp.float32)
    for p in params:
        y = ln(out, p["ln1_g"], p["ln1_b"])
        qkv = (y @ p["w_qkv"]).reshape(B, N, 3, H, hd).transpose(2, 0, 3, 1, 4)
        q, k, v = qkv[0], qkv[1], qkv[2]
        s = jnp.einsum("bhnd,bhmd->bhnm", q, k) * scale
        a = jax.nn.softmax(s, axis=-1)
        o = jnp.einsum("bhnm,bhmd->bhnd", a, v)
        o = o.transpose(0, 2, 1, 3).reshape(B, N, D)
        out = out + o @ p["w_proj"] + p["b_proj"]

        y = ln(out, p["ln2_g"], p["ln2_b"])
        h = y @ p["w1"] + p["b1"]
        h = 0.5 * h * (1.0 + jnp.tanh(_GELU_C * (h + 0.044715 * h ** 3)))
        out = out + h @ p["w2"] + p["b2"]
    return out.astype(x.dtype)


def make_params(key, depth, dim, mlp_dim):
    params = []
    for _ in range(depth):
        keys = jax.random.split(key, 13)
        key = keys[0]
        params.append(dict(
            ln1_g=1.0 + 0.1 * jax.random.normal(keys[1], (dim,), jnp.float32),
            ln1_b=0.1 * jax.random.normal(keys[2], (dim,), jnp.float32),
            w_qkv=jax.random.normal(keys[3], (dim, 3 * dim), jnp.float32) / jnp.sqrt(dim),
            w_proj=jax.random.normal(keys[4], (dim, dim), jnp.float32) / jnp.sqrt(dim),
            b_proj=0.1 * jax.random.normal(keys[5], (dim,), jnp.float32),
            ln2_g=1.0 + 0.1 * jax.random.normal(keys[6], (dim,), jnp.float32),
            ln2_b=0.1 * jax.random.normal(keys[7], (dim,), jnp.float32),
            w1=jax.random.normal(keys[8], (dim, mlp_dim), jnp.float32) / jnp.sqrt(dim),
            b1=0.1 * jax.random.normal(keys[9], (mlp_dim,), jnp.float32),
            w2=jax.random.normal(keys[10], (mlp_dim, dim), jnp.float32) / jnp.sqrt(mlp_dim),
            b2=0.1 * jax.random.normal(keys[11], (dim,), jnp.float32),
        ))
    return params


if __name__ == "__main__":
    key = jax.random.PRNGKey(0)
    B, N, D = 2, 8, 32                 # batch=2, seq=8, dim=32
    heads, mlp_dim, depth = 4, 64, 2   # head_dim=8

    k_x, k_p = jax.random.split(key)
    x = jax.random.normal(k_x, (B, N, D), dtype=jnp.float32)
    params = make_params(k_p, depth, D, mlp_dim)

    out = transformer_forward(x, params, heads=heads)
    jax.block_until_ready(out)

    ref = _reference(x, params, heads)
    assert out.shape == (B, N, D)
    assert jnp.allclose(out, ref, atol=2e-4, rtol=2e-4), "mismatch vs reference"

    print("KERNEL_OK")
</pallas_src>

<mosaic_0001>
module attributes {stable_mosaic.version = 11 : i64} {
  func.func @_ln_matmul_kernel(%arg0: i32, %arg1: memref<16x32xf32, #tpu.memory_space<vmem>>, %arg2: memref<1x32xf32, #tpu.memory_space<vmem>>, %arg3: memref<1x32xf32, #tpu.memory_space<vmem>>, %arg4: memref<32x96xf32, #tpu.memory_space<vmem>>, %arg5: memref<16x96xf32, #tpu.memory_space<vmem>>) attributes {dimension_semantics = [#tpu.dimension_semantics<parallel>], iteration_bounds = array<i64: 1>, scalar_prefetch = 0 : i64, scratch_operands = 0 : i64, tpu.core_type = #tpu.core_type<tc>, window_params = [{transform_indices = @transform_0, window_bounds = array<i64: 16, 32>}, {pipeline_mode = #tpu.pipeline_mode<synchronous>, transform_indices = @transform_1, window_bounds = array<i64: 1, 32>}, {pipeline_mode = #tpu.pipeline_mode<synchronous>, transform_indices = @transform_2, window_bounds = array<i64: 1, 32>}, {pipeline_mode = #tpu.pipeline_mode<synchronous>, transform_indices = @transform_3, window_bounds = array<i64: 32, 96>}, {transform_indices = @transform_4, window_bounds = array<i64: 16, 96>}]} {
    %c0 = arith.constant 0 : index
    %c0_0 = arith.constant 0 : index
    %0 = vector.load %arg1[%c0, %c0_0] : memref<16x32xf32, #tpu.memory_space<vmem>>, vector<16x32xf32>
    %cst = arith.constant dense<0.000000e+00> : vector<16xf32>
    %1 = vector.multi_reduction <add>, %0, %cst [1] : vector<16x32xf32> to vector<16xf32>
    %2 = vector.shape_cast %1 : vector<16xf32> to vector<16x1xf32>
    %cst_1 = arith.constant 3.200000e+01 : f32
    %3 = vector.broadcast %cst_1 : f32 to vector<16x1xf32>
    %4 = arith.divf %2, %3 : vector<16x1xf32>
    %5 = vector.broadcast %4 : vector<16x1xf32> to vector<16x32xf32>
    %6 = arith.subf %0, %5 : vector<16x32xf32>
    %7 = arith.mulf %6, %6 : vector<16x32xf32>
    %cst_2 = arith.constant dense<0.000000e+00> : vector<16xf32>
    %8 = vector.multi_reduction <add>, %7, %cst_2 [1] : vector<16x32xf32> to vector<16xf32>
    %9 = vector.shape_cast %8 : vector<16xf32> to vector<16x1xf32>
    %cst_3 = arith.constant 3.200000e+01 : f32
    %10 = vector.broadcast %cst_3 : f32 to vector<16x1xf32>
    %11 = arith.divf %9, %10 : vector<16x1xf32>
    %cst_4 = arith.constant 9.99999974E-6 : f32
    %12 = vector.broadcast %cst_4 : f32 to vector<16x1xf32>
    %13 = arith.addf %11, %12 : vector<16x1xf32>
    %14 = math.rsqrt %13 : vector<16x1xf32>
    %15 = vector.broadcast %14 : vector<16x1xf32> to vector<16x32xf32>
    %16 = arith.mulf %6, %15 : vector<16x32xf32>
    %c0_5 = arith.constant 0 : index
    %c0_6 = arith.constant 0 : index
    %17 = vector.load %arg2[%c0_5, %c0_6] : memref<1x32xf32, #tpu.memory_space<vmem>>, vector<1x32xf32>
    %18 = vector.broadcast %17 : vector<1x32xf32> to vector<16x32xf32>
    %19 = arith.mulf %16, %18 : vector<16x32xf32>
    %c0_7 = arith.constant 0 : index
    %c0_8 = arith.constant 0 : index
    %20 = vector.load %arg3[%c0_7, %c0_8] : memref<1x32xf32, #tpu.memory_space<vmem>>, vector<1x32xf32>
    %21 = vector.broadcast %20 : vector<1x32xf32> to vector<16x32xf32>
    %22 = arith.addf %19, %21 : vector<16x32xf32>
    %c0_9 = arith.constant 0 : index
    %c0_10 = arith.constant 0 : index
    %23 = vector.load %arg4[%c0_9, %c0_10] : memref<32x96xf32, #tpu.memory_space<vmem>>, vector<32x96xf32>
    %cst_11 = arith.constant dense<0.000000e+00> : vector<16x96xf32>
    %24 = tpu.matmul %22, %23, %cst_11 {dimension_numbers = #tpu.dot_dimension_numbers<[1], [0], [0], [1], [0, 0, 1, 1], [], []>} : vector<16x32xf32>, vector<32x96xf32>, vector<16x96xf32> -> vector<16x96xf32>
    %c0_12 = arith.constant 0 : index
    %c0_13 = arith.constant 0 : index
    %25 = vector.load %arg5[%c0_12, %c0_13] : memref<16x96xf32, #tpu.memory_space<vmem>>, vector<16x96xf32>
    tpu.vector_store %arg5[%c0_12, %c0_13], %24 {strides = array<i32>} : memref<16x96xf32, #tpu.memory_space<vmem>>, vector<16x96xf32>,
    return
  }
  func.func @transform_0(%arg0: i32) -> (i32, i32) {
    %c0_i32 = arith.constant 0 : i32
    %c0_i32_0 = arith.constant 0 : i32
    return %arg0, %c0_i32 : i32, i32
  }
  func.func @transform_1(%arg0: i32) -> (i32, i32) {
    %c0_i32 = arith.constant 0 : i32
    %c0_i32_0 = arith.constant 0 : i32
    %c0_i32_1 = arith.constant 0 : i32
    return %c0_i32, %c0_i32_0 : i32, i32
  }
  func.func @transform_2(%arg0: i32) -> (i32, i32) {
    %c0_i32 = arith.constant 0 : i32
    %c0_i32_0 = arith.constant 0 : i32
    %c0_i32_1 = arith.constant 0 : i32
    return %c0_i32, %c0_i32_0 : i32, i32
  }
  func.func @transform_3(%arg0: i32) -> (i32, i32) {
    %c0_i32 = arith.constant 0 : i32
    %c0_i32_0 = arith.constant 0 : i32
    %c0_i32_1 = arith.constant 0 : i32
    return %c0_i32, %c0_i32_0 : i32, i32
  }
  func.func @transform_4(%arg0: i32) -> (i32, i32) {
    %c0_i32 = arith.constant 0 : i32
    %c0_i32_0 = arith.constant 0 : i32
    return %arg0, %c0_i32 : i32, i32
  }
}

module attributes {stable_mosaic.version = 11 : i64} {
  func.func @_attention_kernel(%arg0: i32, %arg1: memref<1x8x8xf32, #tpu.memory_space<vmem>>, %arg2: memref<1x8x8xf32, #tpu.memory_space<vmem>>, %arg3: memref<1x8x8xf32, #tpu.memory_space<vmem>>, %arg4: memref<1x8x8xf32, #tpu.memory_space<vmem>>) attributes {dimension_semantics = [#tpu.dimension_semantics<parallel>], iteration_bounds = array<i64: 8>, scalar_prefetch = 0 : i64, scratch_operands = 0 : i64, tpu.core_type = #tpu.core_type<tc>, window_params = [{transform_indices = @transform_0, window_bounds = array<i64: 1, 8, 8>}, {transform_indices = @transform_1, window_bounds = array<i64: 1, 8, 8>}, {transform_indices = @transform_2, window_bounds = array<i64: 1, 8, 8>}, {transform_indices = @transform_3, window_bounds = array<i64: 1, 8, 8>}]} {
    %c0 = arith.constant 0 : index
    %c0_0 = arith.constant 0 : index
    %c0_1 = arith.constant 0 : index
    %0 = vector.load %arg1[%c0, %c0_0, %c0_1] : memref<1x8x8xf32, #tpu.memory_space<vmem>>, vector<1x8x8xf32>
    %c0_2 = arith.constant 0 : index
    %c0_3 = arith.constant 0 : index
    %c0_4 = arith.constant 0 : index
    %1 = vector.load %arg2[%c0_2, %c0_3, %c0_4] : memref<1x8x8xf32, #tpu.memory_space<vmem>>, vector<1x8x8xf32>
    "tpu.trace_start"() <{level = 10 : i32, message = "bqd,bkd->bqk"}> : () -> ()
    %cst = arith.constant dense<0.000000e+00> : vector<1x8x8xf32>
    %2 = tpu.matmul %0, %1, %cst {dimension_numbers = #tpu.dot_dimension_numbers<[2], [2], [1], [1], [0, 0, 0, 1, 1, 1], [0], [0]>} : vector<1x8x8xf32>, vector<1x8x8xf32>, vector<1x8x8xf32> -> vector<1x8x8xf32>
    "tpu.trace_stop"() : () -> ()
    %cst_5 = arith.constant 0.353553385 : f32
    %3 = vector.broadcast %cst_5 : f32 to vector<1x8x8xf32>
    %4 = arith.mulf %2, %3 : vector<1x8x8xf32>
    %cst_6 = arith.constant dense<0xFF800000> : vector<1x8xf32>
    %5 = vector.multi_reduction <maximumf>, %4, %cst_6 [2] : vector<1x8x8xf32> to vector<1x8xf32>
    %6 = vector.shape_cast %5 : vector<1x8xf32> to vector<1x8x1xf32>
    %7 = vector.broadcast %6 : vector<1x8x1xf32> to vector<1x8x8xf32>
    %8 = arith.subf %4, %7 : vector<1x8x8xf32>
    %9 = math.exp %8 : vector<1x8x8xf32>
    %cst_7 = arith.constant dense<0.000000e+00> : vector<1x8xf32>
    %10 = vector.multi_reduction <add>, %9, %cst_7 [2] : vector<1x8x8xf32> to vector<1x8xf32>
    %11 = vector.shape_cast %10 : vector<1x8xf32> to vector<1x8x1xf32>
    %12 = vector.broadcast %11 : vector<1x8x1xf32> to vector<1x8x8xf32>
    %13 = arith.divf %9, %12 : vector<1x8x8xf32>
    %c0_8 = arith.constant 0 : index
    %c0_9 = arith.constant 0 : index
    %c0_10 = arith.constant 0 : index
    %14 = vector.load %arg3[%c0_8, %c0_9, %c0_10] : memref<1x8x8xf32, #tpu.memory_space<vmem>>, vector<1x8x8xf32>
    "tpu.trace_start"() <{level = 10 : i32, message = "bqk,bkd->bqd"}> : () -> ()
    %cst_11 = arith.constant dense<0.000000e+00> : vector<1x8x8xf32>
    %15 = tpu.matmul %13, %14, %cst_11 {dimension_numbers = #tpu.dot_dimension_numbers<[2], [1], [1], [2], [0, 0, 0, 1, 1, 2], [0], [0]>} : vector<1x8x8xf32>, vector<1x8x8xf32>, vector<1x8x8xf32> -> vector<1x8x8xf32>
    "tpu.trace_stop"() : () -> ()
    %c0_12 = arith.constant 0 : index
    %c0_13 = arith.constant 0 : index
    %c0_14 = arith.constant 0 : index
    %16 = vector.load %arg4[%c0_12, %c0_13, %c0_14] : memref<1x8x8xf32, #tpu.memory_space<vmem>>, vector<1x8x8xf32>
    tpu.vector_store %arg4[%c0_12, %c0_13, %c0_14], %15 {strides = array<i32>} : memref<1x8x8xf32, #tpu.memory_space<vmem>>, vector<1x8x8xf32>,
    return
  }
  func.func @transform_0(%arg0: i32) -> (i32, i32, i32) {
    %c0_i32 = arith.constant 0 : i32
    %c0_i32_0 = arith.constant 0 : i32
    %c0_i32_1 = arith.constant 0 : i32
    return %arg0, %c0_i32, %c0_i32_0 : i32, i32, i32
  }
  func.func @transform_1(%arg0: i32) -> (i32, i32, i32) {
    %c0_i32 = arith.constant 0 : i32
    %c0_i32_0 = arith.constant 0 : i32
    %c0_i32_1 = arith.constant 0 : i32
    return %arg0, %c0_i32, %c0_i32_0 : i32, i32, i32
  }
  func.func @transform_2(%arg0: i32) -> (i32, i32, i32) {
    %c0_i32 = arith.constant 0 : i32
    %c0_i32_0 = arith.constant 0 : i32
    %c0_i32_1 = arith.constant 0 : i32
    return %arg0, %c0_i32, %c0_i32_0 : i32, i32, i32
  }
  func.func @transform_3(%arg0: i32) -> (i32, i32, i32) {
    %c0_i32 = arith.constant 0 : i32
    %c0_i32_0 = arith.constant 0 : i32
    %c0_i32_1 = arith.constant 0 : i32
    return %arg0, %c0_i32, %c0_i32_0 : i32, i32, i32
  }
}

module attributes {stable_mosaic.version = 11 : i64} {
  func.func @_matmul_bias_residual_kernel(%arg0: i32, %arg1: memref<16x32xf32, #tpu.memory_space<vmem>>, %arg2: memref<16x32xf32, #tpu.memory_space<vmem>>, %arg3: memref<32x32xf32, #tpu.memory_space<vmem>>, %arg4: memref<1x32xf32, #tpu.memory_space<vmem>>, %arg5: memref<16x32xf32, #tpu.memory_space<vmem>>) attributes {dimension_semantics = [#tpu.dimension_semantics<parallel>], iteration_bounds = array<i64: 1>, scalar_prefetch = 0 : i64, scratch_operands = 0 : i64, tpu.core_type = #tpu.core_type<tc>, window_params = [{transform_indices = @transform_0, window_bounds = array<i64: 16, 32>}, {transform_indices = @transform_1, window_bounds = array<i64: 16, 32>}, {pipeline_mode = #tpu.pipeline_mode<synchronous>, transform_indices = @transform_2, window_bounds = array<i64: 32, 32>}, {pipeline_mode = #tpu.pipeline_mode<synchronous>, transform_indices = @transform_3, window_bounds = array<i64: 1, 32>}, {transform_indices = @transform_4, window_bounds = array<i64: 16, 32>}]} {
    %c0 = arith.constant 0 : index
    %c0_0 = arith.constant 0 : index
    %0 = vector.load %arg1[%c0, %c0_0] : memref<16x32xf32, #tpu.memory_space<vmem>>, vector<16x32xf32>
    %c0_1 = arith.constant 0 : index
    %c0_2 = arith.constant 0 : index
    %1 = vector.load %arg3[%c0_1, %c0_2] : memref<32x32xf32, #tpu.memory_space<vmem>>, vector<32x32xf32>
    %cst = arith.constant dense<0.000000e+00> : vector<16x32xf32>
    %2 = tpu.matmul %0, %1, %cst {dimension_numbers = #tpu.dot_dimension_numbers<[1], [0], [0], [1], [0, 0, 1, 1], [], []>} : vector<16x32xf32>, vector<32x32xf32>, vector<16x32xf32> -> vector<16x32xf32>
    %c0_3 = arith.constant 0 : index
    %c0_4 = arith.constant 0 : index
    %3 = vector.load %arg4[%c0_3, %c0_4] : memref<1x32xf32, #tpu.memory_space<vmem>>, vector<1x32xf32>
    %4 = vector.broadcast %3 : vector<1x32xf32> to vector<16x32xf32>
    %5 = arith.addf %2, %4 : vector<16x32xf32>
    %c0_5 = arith.constant 0 : index
    %c0_6 = arith.constant 0 : index
    %6 = vector.load %arg2[%c0_5, %c0_6] : memref<16x32xf32, #tpu.memory_space<vmem>>, vector<16x32xf32>
    %7 = arith.addf %5, %6 : vector<16x32xf32>
    %c0_7 = arith.constant 0 : index
    %c0_8 = arith.constant 0 : index
    %8 = vector.load %arg5[%c0_7, %c0_8] : memref<16x32xf32, #tpu.memory_space<vmem>>, vector<16x32xf32>
    tpu.vector_store %arg5[%c0_7, %c0_8], %7 {strides = array<i32>} : memref<16x32xf32, #tpu.memory_space<vmem>>, vector<16x32xf32>,
    return
  }
  func.func @transform_0(%arg0: i32) -> (i32, i32) {
    %c0_i32 = arith.constant 0 : i32
    %c0_i32_0 = arith.constant 0 : i32
    return %arg0, %c0_i32 : i32, i32
  }
  func.func @transform_1(%arg0: i32) -> (i32, i32) {
    %c0_i32 = arith.constant 0 : i32
    %c0_i32_0 = arith.constant 0 : i32
    return %arg0, %c0_i32 : i32, i32
  }
  func.func @transform_2(%arg0: i32) -> (i32, i32) {
    %c0_i32 = arith.constant 0 : i32
    %c0_i32_0 = arith.constant 0 : i32
    %c0_i32_1 = arith.constant 0 : i32
    return %c0_i32, %c0_i32_0 : i32, i32
  }
  func.func @transform_3(%arg0: i32) -> (i32, i32) {
    %c0_i32 = arith.constant 0 : i32
    %c0_i32_0 = arith.constant 0 : i32
    %c0_i32_1 = arith.constant 0 : i32
    return %c0_i32, %c0_i32_0 : i32, i32
  }
  func.func @transform_4(%arg0: i32) -> (i32, i32) {
    %c0_i32 = arith.constant 0 : i32
    %c0_i32_0 = arith.constant 0 : i32
    return %arg0, %c0_i32 : i32, i32
  }
}

module attributes {stable_mosaic.version = 11 : i64} {
  func.func @_prenorm_ff_kernel(%arg0: i32, %arg1: memref<16x32xf32, #tpu.memory_space<vmem>>, %arg2: memref<1x32xf32, #tpu.memory_space<vmem>>, %arg3: memref<1x32xf32, #tpu.memory_space<vmem>>, %arg4: memref<32x64xf32, #tpu.memory_space<vmem>>, %arg5: memref<1x64xf32, #tpu.memory_space<vmem>>, %arg6: memref<64x32xf32, #tpu.memory_space<vmem>>, %arg7: memref<1x32xf32, #tpu.memory_space<vmem>>, %arg8: memref<16x32xf32, #tpu.memory_space<vmem>>) attributes {dimension_semantics = [#tpu.dimension_semantics<parallel>], iteration_bounds = array<i64: 1>, scalar_prefetch = 0 : i64, scratch_operands = 0 : i64, tpu.core_type = #tpu.core_type<tc>, window_params = [{transform_indices = @transform_0, window_bounds = array<i64: 16, 32>}, {pipeline_mode = #tpu.pipeline_mode<synchronous>, transform_indices = @transform_1, window_bounds = array<i64: 1, 32>}, {pipeline_mode = #tpu.pipeline_mode<synchronous>, transform_indices = @transform_2, window_bounds = array<i64: 1, 32>}, {pipeline_mode = #tpu.pipeline_mode<synchronous>, transform_indices = @transform_3, window_bounds = array<i64: 32, 64>}, {pipeline_mode = #tpu.pipeline_mode<synchronous>, transform_indices = @transform_4, window_bounds = array<i64: 1, 64>}, {pipeline_mode = #tpu.pipeline_mode<synchronous>, transform_indices = @transform_5, window_bounds = array<i64: 64, 32>}, {pipeline_mode = #tpu.pipeline_mode<synchronous>, transform_indices = @transform_6, window_bounds = array<i64: 1, 32>}, {transform_indices = @transform_7, window_bounds = array<i64: 16, 32>}]} {
    %c0 = arith.constant 0 : index
    %c0_0 = arith.constant 0 : index
    %0 = vector.load %arg1[%c0, %c0_0] : memref<16x32xf32, #tpu.memory_space<vmem>>, vector<16x32xf32>
    %cst = arith.constant dense<0.000000e+00> : vector<16xf32>
    %1 = vector.multi_reduction <add>, %0, %cst [1] : vector<16x32xf32> to vector<16xf32>
    %2 = vector.shape_cast %1 : vector<16xf32> to vector<16x1xf32>
    %cst_1 = arith.constant 3.200000e+01 : f32
    %3 = vector.broadcast %cst_1 : f32 to vector<16x1xf32>
    %4 = arith.divf %2, %3 : vector<16x1xf32>
    %5 = vector.broadcast %4 : vector<16x1xf32> to vector<16x32xf32>
    %6 = arith.subf %0, %5 : vector<16x32xf32>
    %7 = arith.mulf %6, %6 : vector<16x32xf32>
    %cst_2 = arith.constant dense<0.000000e+00> : vector<16xf32>
    %8 = vector.multi_reduction <add>, %7, %cst_2 [1] : vector<16x32xf32> to vector<16xf32>
    %9 = vector.shape_cast %8 : vector<16xf32> to vector<16x1xf32>
    %cst_3 = arith.constant 3.200000e+01 : f32
    %10 = vector.broadcast %cst_3 : f32 to vector<16x1xf32>
    %11 = arith.divf %9, %10 : vector<16x1xf32>
    %cst_4 = arith.constant 9.99999974E-6 : f32
    %12 = vector.broadcast %cst_4 : f32 to vector<16x1xf32>
    %13 = arith.addf %11, %12 : vector<16x1xf32>
    %14 = math.rsqrt %13 : vector<16x1xf32>
    %15 = vector.broadcast %14 : vector<16x1xf32> to vector<16x32xf32>
    %16 = arith.mulf %6, %15 : vector<16x32xf32>
    %c0_5 = arith.constant 0 : index
    %c0_6 = arith.constant 0 : index
    %17 = vector.load %arg2[%c0_5, %c0_6] : memref<1x32xf32, #tpu.memory_space<vmem>>, vector<1x32xf32>
    %18 = vector.broadcast %17 : vector<1x32xf32> to vector<16x32xf32>
    %19 = arith.mulf %16, %18 : vector<16x32xf32>
    %c0_7 = arith.constant 0 : index
    %c0_8 = arith.constant 0 : index
    %20 = vector.load %arg3[%c0_7, %c0_8] : memref<1x32xf32, #tpu.memory_space<vmem>>, vector<1x32xf32>
    %21 = vector.broadcast %20 : vector<1x32xf32> to vector<16x32xf32>
    %22 = arith.addf %19, %21 : vector<16x32xf32>
    %c0_9 = arith.constant 0 : index
    %c0_10 = arith.constant 0 : index
    %23 = vector.load %arg4[%c0_9, %c0_10] : memref<32x64xf32, #tpu.memory_space<vmem>>, vector<32x64xf32>
    %cst_11 = arith.constant dense<0.000000e+00> : vector<16x64xf32>
    %24 = tpu.matmul %22, %23, %cst_11 {dimension_numbers = #tpu.dot_dimension_numbers<[1], [0], [0], [1], [0, 0, 1, 1], [], []>} : vector<16x32xf32>, vector<32x64xf32>, vector<16x64xf32> -> vector<16x64xf32>
    %c0_12 = arith.constant 0 : index
    %c0_13 = arith.constant 0 : index
    %25 = vector.load %arg5[%c0_12, %c0_13] : memref<1x64xf32, #tpu.memory_space<vmem>>, vector<1x64xf32>
    %26 = vector.broadcast %25 : vector<1x64xf32> to vector<16x64xf32>
    %27 = arith.addf %24, %26 : vector<16x64xf32>
    %cst_14 = arith.constant 5.000000e-01 : f32
    %28 = vector.broadcast %cst_14 : f32 to vector<16x64xf32>
    %29 = arith.mulf %28, %27 : vector<16x64xf32>
    %cst_15 = arith.constant 4.471500e-02 : f32
    %30 = vector.broadcast %cst_15 : f32 to vector<16x64xf32>
    %31 = arith.mulf %30, %27 : vector<16x64xf32>
    %32 = arith.mulf %31, %27 : vector<16x64xf32>
    %33 = arith.mulf %32, %27 : vector<16x64xf32>
    %34 = arith.addf %27, %33 : vector<16x64xf32>
    %cst_16 = arith.constant 0.797884583 : f32
    %35 = vector.broadcast %cst_16 : f32 to vector<16x64xf32>
    %36 = arith.mulf %35, %34 : vector<16x64xf32>
    %37 = math.tanh %36 : vector<16x64xf32>
    %cst_17 = arith.constant 1.000000e+00 : f32
    %38 = vector.broadcast %cst_17 : f32 to vector<16x64xf32>
    %39 = arith.addf %38, %37 : vector<16x64xf32>
    %40 = arith.mulf %29, %39 : vector<16x64xf32>
    %c0_18 = arith.constant 0 : index
    %c0_19 = arith.constant 0 : index
    %41 = vector.load %arg6[%c0_18, %c0_19] : memref<64x32xf32, #tpu.memory_space<vmem>>, vector<64x32xf32>
    %cst_20 = arith.constant dense<0.000000e+00> : vector<16x32xf32>
    %42 = tpu.matmul %40, %41, %cst_20 {dimension_numbers = #tpu.dot_dimension_numbers<[1], [0], [0], [1], [0, 0, 1, 1], [], []>} : vector<16x64xf32>, vector<64x32xf32>, vector<16x32xf32> -> vector<16x32xf32>
    %c0_21 = arith.constant 0 : index
    %c0_22 = arith.constant 0 : index
    %43 = vector.load %arg7[%c0_21, %c0_22] : memref<1x32xf32, #tpu.memory_space<vmem>>, vector<1x32xf32>
    %44 = vector.broadcast %43 : vector<1x32xf32> to vector<16x32xf32>
    %45 = arith.addf %42, %44 : vector<16x32xf32>
    %46 = arith.addf %45, %0 : vector<16x32xf32>
    %c0_23 = arith.constant 0 : index
    %c0_24 = arith.constant 0 : index
    %47 = vector.load %arg8[%c0_23, %c0_24] : memref<16x32xf32, #tpu.memory_space<vmem>>, vector<16x32xf32>
    tpu.vector_store %arg8[%c0_23, %c0_24], %46 {strides = array<i32>} : memref<16x32xf32, #tpu.memory_space<vmem>>, vector<16x32xf32>,
    return
  }
  func.func @transform_0(%arg0: i32) -> (i32, i32) {
    %c0_i32 = arith.constant 0 : i32
    %c0_i32_0 = arith.constant 0 : i32
    return %arg0, %c0_i32 : i32, i32
  }
  func.func @transform_1(%arg0: i32) -> (i32, i32) {
    %c0_i32 = arith.constant 0 : i32
    %c0_i32_0 = arith.constant 0 : i32
    %c0_i32_1 = arith.constant 0 : i32
    return %c0_i32, %c0_i32_0 : i32, i32
  }
  func.func @transform_2(%arg0: i32) -> (i32, i32) {
    %c0_i32 = arith.constant 0 : i32
    %c0_i32_0 = arith.constant 0 : i32
    %c0_i32_1 = arith.constant 0 : i32
    return %c0_i32, %c0_i32_0 : i32, i32
  }
  func.func @transform_3(%arg0: i32) -> (i32, i32) {
    %c0_i32 = arith.constant 0 : i32
    %c0_i32_0 = arith.constant 0 : i32
    %c0_i32_1 = arith.constant 0 : i32
    return %c0_i32, %c0_i32_0 : i32, i32
  }
  func.func @transform_4(%arg0: i32) -> (i32, i32) {
    %c0_i32 = arith.constant 0 : i32
    %c0_i32_0 = arith.constant 0 : i32
    %c0_i32_1 = arith.constant 0 : i32
    return %c0_i32, %c0_i32_0 : i32, i32
  }
  func.func @transform_5(%arg0: i32) -> (i32, i32) {
    %c0_i32 = arith.constant 0 : i32
    %c0_i32_0 = arith.constant 0 : i32
    %c0_i32_1 = arith.constant 0 : i32
    return %c0_i32, %c0_i32_0 : i32, i32
  }
  func.func @transform_6(%arg0: i32) -> (i32, i32) {
    %c0_i32 = arith.constant 0 : i32
    %c0_i32_0 = arith.constant 0 : i32
    %c0_i32_1 = arith.constant 0 : i32
    return %c0_i32, %c0_i32_0 : i32, i32
  }
  func.func @transform_7(%arg0: i32) -> (i32, i32) {
    %c0_i32 = arith.constant 0 : i32
    %c0_i32_0 = arith.constant 0 : i32
    return %arg0, %c0_i32 : i32, i32
  }
}

module attributes {stable_mosaic.version = 11 : i64} {
  func.func @_ln_matmul_kernel(%arg0: i32, %arg1: memref<16x32xf32, #tpu.memory_space<vmem>>, %arg2: memref<1x32xf32, #tpu.memory_space<vmem>>, %arg3: memref<1x32xf32, #tpu.memory_space<vmem>>, %arg4: memref<32x96xf32, #tpu.memory_space<vmem>>, %arg5: memref<16x96xf32, #tpu.memory_space<vmem>>) attributes {dimension_semantics = [#tpu.dimension_semantics<parallel>], iteration_bounds = array<i64: 1>, scalar_prefetch = 0 : i64, scratch_operands = 0 : i64, tpu.core_type = #tpu.core_type<tc>, window_params = [{transform_indices = @transform_0, window_bounds = array<i64: 16, 32>}, {pipeline_mode = #tpu.pipeline_mode<synchronous>, transform_indices = @transform_1, window_bounds = array<i64: 1, 32>}, {pipeline_mode = #tpu.pipeline_mode<synchronous>, transform_indices = @transform_2, window_bounds = array<i64: 1, 32>}, {pipeline_mode = #tpu.pipeline_mode<synchronous>, transform_indices = @transform_3, window_bounds = array<i64: 32, 96>}, {transform_indices = @transform_4, window_bounds = array<i64: 16, 96>}]} {
    %c0 = arith.constant 0 : index
    %c0_0 = arith.constant 0 : index
    %0 = vector.load %arg1[%c0, %c0_0] : memref<16x32xf32, #tpu.memory_space<vmem>>, vector<16x32xf32>
    %cst = arith.constant dense<0.000000e+00> : vector<16xf32>
    %1 = vector.multi_reduction <add>, %0, %cst [1] : vector<16x32xf32> to vector<16xf32>
    %2 = vector.shape_cast %1 : vector<16xf32> to vector<16x1xf32>
    %cst_1 = arith.constant 3.200000e+01 : f32
    %3 = vector.broadcast %cst_1 : f32 to vector<16x1xf32>
    %4 = arith.divf %2, %3 : vector<16x1xf32>
    %5 = vector.broadcast %4 : vector<16x1xf32> to vector<16x32xf32>
    %6 = arith.subf %0, %5 : vector<16x32xf32>
    %7 = arith.mulf %6, %6 : vector<16x32xf32>
    %cst_2 = arith.constant dense<0.000000e+00> : vector<16xf32>
    %8 = vector.multi_reduction <add>, %7, %cst_2 [1] : vector<16x32xf32> to vector<16xf32>
    %9 = vector.shape_cast %8 : vector<16xf32> to vector<16x1xf32>
    %cst_3 = arith.constant 3.200000e+01 : f32
    %10 = vector.broadcast %cst_3 : f32 to vector<16x1xf32>
    %11 = arith.divf %9, %10 : vector<16x1xf32>
    %cst_4 = arith.constant 9.99999974E-6 : f32
    %12 = vector.broadcast %cst_4 : f32 to vector<16x1xf32>
    %13 = arith.addf %11, %12 : vector<16x1xf32>
    %14 = math.rsqrt %13 : vector<16x1xf32>
    %15 = vector.broadcast %14 : vector<16x1xf32> to vector<16x32xf32>
    %16 = arith.mulf %6, %15 : vector<16x32xf32>
    %c0_5 = arith.constant 0 : index
    %c0_6 = arith.constant 0 : index
    %17 = vector.load %arg2[%c0_5, %c0_6] : memref<1x32xf32, #tpu.memory_space<vmem>>, vector<1x32xf32>
    %18 = vector.broadcast %17 : vector<1x32xf32> to vector<16x32xf32>
    %19 = arith.mulf %16, %18 : vector<16x32xf32>
    %c0_7 = arith.constant 0 : index
    %c0_8 = arith.constant 0 : index
    %20 = vector.load %arg3[%c0_7, %c0_8] : memref<1x32xf32, #tpu.memory_space<vmem>>, vector<1x32xf32>
    %21 = vector.broadcast %20 : vector<1x32xf32> to vector<16x32xf32>
    %22 = arith.addf %19, %21 : vector<16x32xf32>
    %c0_9 = arith.constant 0 : index
    %c0_10 = arith.constant 0 : index
    %23 = vector.load %arg4[%c0_9, %c0_10] : memref<32x96xf32, #tpu.memory_space<vmem>>, vector<32x96xf32>
    %cst_11 = arith.constant dense<0.000000e+00> : vector<16x96xf32>
    %24 = tpu.matmul %22, %23, %cst_11 {dimension_numbers = #tpu.dot_dimension_numbers<[1], [0], [0], [1], [0, 0, 1, 1], [], []>} : vector<16x32xf32>, vector<32x96xf32>, vector<16x96xf32> -> vector<16x96xf32>
    %c0_12 = arith.constant 0 : index
    %c0_13 = arith.constant 0 : index
    %25 = vector.load %arg5[%c0_12, %c0_13] : memref<16x96xf32, #tpu.memory_space<vmem>>, vector<16x96xf32>
    tpu.vector_store %arg5[%c0_12, %c0_13], %24 {strides = array<i32>} : memref<16x96xf32, #tpu.memory_space<vmem>>, vector<16x96xf32>,
    return
  }
  func.func @transform_0(%arg0: i32) -> (i32, i32) {
    %c0_i32 = arith.constant 0 : i32
    %c0_i32_0 = arith.constant 0 : i32
    return %arg0, %c0_i32 : i32, i32
  }
  func.func @transform_1(%arg0: i32) -> (i32, i32) {
    %c0_i32 = arith.constant 0 : i32
    %c0_i32_0 = arith.constant 0 : i32
    %c0_i32_1 = arith.constant 0 : i32
    return %c0_i32, %c0_i32_0 : i32, i32
  }
  func.func @transform_2(%arg0: i32) -> (i32, i32) {
    %c0_i32 = arith.constant 0 : i32
    %c0_i32_0 = arith.constant 0 : i32
    %c0_i32_1 = arith.constant 0 : i32
    return %c0_i32, %c0_i32_0 : i32, i32
  }
  func.func @transform_3(%arg0: i32) -> (i32, i32) {
    %c0_i32 = arith.constant 0 : i32
    %c0_i32_0 = arith.constant 0 : i32
    %c0_i32_1 = arith.constant 0 : i32
    return %c0_i32, %c0_i32_0 : i32, i32
  }
  func.func @transform_4(%arg0: i32) -> (i32, i32) {
    %c0_i32 = arith.constant 0 : i32
    %c0_i32_0 = arith.constant 0 : i32
    return %arg0, %c0_i32 : i32, i32
  }
}

module attributes {stable_mosaic.version = 11 : i64} {
  func.func @_prenorm_ff_kernel(%arg0: i32, %arg1: memref<16x32xf32, #tpu.memory_space<vmem>>, %arg2: memref<1x32xf32, #tpu.memory_space<vmem>>, %arg3: memref<1x32xf32, #tpu.memory_space<vmem>>, %arg4: memref<32x64xf32, #tpu.memory_space<vmem>>, %arg5: memref<1x64xf32, #tpu.memory_space<vmem>>, %arg6: memref<64x32xf32, #tpu.memory_space<vmem>>, %arg7: memref<1x32xf32, #tpu.memory_space<vmem>>, %arg8: memref<16x32xf32, #tpu.memory_space<vmem>>) attributes {dimension_semantics = [#tpu.dimension_semantics<parallel>], iteration_bounds = array<i64: 1>, scalar_prefetch = 0 : i64, scratch_operands = 0 : i64, tpu.core_type = #tpu.core_type<tc>, window_params = [{transform_indices = @transform_0, window_bounds = array<i64: 16, 32>}, {pipeline_mode = #tpu.pipeline_mode<synchronous>, transform_indices = @transform_1, window_bounds = array<i64: 1, 32>}, {pipeline_mode = #tpu.pipeline_mode<synchronous>, transform_indices = @transform_2, window_bounds = array<i64: 1, 32>}, {pipeline_mode = #tpu.pipeline_mode<synchronous>, transform_indices = @transform_3, window_bounds = array<i64: 32, 64>}, {pipeline_mode = #tpu.pipeline_mode<synchronous>, transform_indices = @transform_4, window_bounds = array<i64: 1, 64>}, {pipeline_mode = #tpu.pipeline_mode<synchronous>, transform_indices = @transform_5, window_bounds = array<i64: 64, 32>}, {pipeline_mode = #tpu.pipeline_mode<synchronous>, transform_indices = @transform_6, window_bounds = array<i64: 1, 32>}, {transform_indices = @transform_7, window_bounds = array<i64: 16, 32>}]} {
    %c0 = arith.constant 0 : index
    %c0_0 = arith.constant 0 : index
    %0 = vector.load %arg1[%c0, %c0_0] : memref<16x32xf32, #tpu.memory_space<vmem>>, vector<16x32xf32>
    %cst = arith.constant dense<0.000000e+00> : vector<16xf32>
    %1 = vector.multi_reduction <add>, %0, %cst [1] : vector<16x32xf32> to vector<16xf32>
    %2 = vector.shape_cast %1 : vector<16xf32> to vector<16x1xf32>
    %cst_1 = arith.constant 3.200000e+01 : f32
    %3 = vector.broadcast %cst_1 : f32 to vector<16x1xf32>
    %4 = arith.divf %2, %3 : vector<16x1xf32>
    %5 = vector.broadcast %4 : vector<16x1xf32> to vector<16x32xf32>
    %6 = arith.subf %0, %5 : vector<16x32xf32>
    %7 = arith.mulf %6, %6 : vector<16x32xf32>
    %cst_2 = arith.constant dense<0.000000e+00> : vector<16xf32>
    %8 = vector.multi_reduction <add>, %7, %cst_2 [1] : vector<16x32xf32> to vector<16xf32>
    %9 = vector.shape_cast %8 : vector<16xf32> to vector<16x1xf32>
    %cst_3 = arith.constant 3.200000e+01 : f32
    %10 = vector.broadcast %cst_3 : f32 to vector<16x1xf32>
    %11 = arith.divf %9, %10 : vector<16x1xf32>
    %cst_4 = arith.constant 9.99999974E-6 : f32
    %12 = vector.broadcast %cst_4 : f32 to vector<16x1xf32>
    %13 = arith.addf %11, %12 : vector<16x1xf32>
    %14 = math.rsqrt %13 : vector<16x1xf32>
    %15 = vector.broadcast %14 : vector<16x1xf32> to vector<16x32xf32>
    %16 = arith.mulf %6, %15 : vector<16x32xf32>
    %c0_5 = arith.constant 0 : index
    %c0_6 = arith.constant 0 : index
    %17 = vector.load %arg2[%c0_5, %c0_6] : memref<1x32xf32, #tpu.memory_space<vmem>>, vector<1x32xf32>
    %18 = vector.broadcast %17 : vector<1x32xf32> to vector<16x32xf32>
    %19 = arith.mulf %16, %18 : vector<16x32xf32>
    %c0_7 = arith.constant 0 : index
    %c0_8 = arith.constant 0 : index
    %20 = vector.load %arg3[%c0_7, %c0_8] : memref<1x32xf32, #tpu.memory_space<vmem>>, vector<1x32xf32>
    %21 = vector.broadcast %20 : vector<1x32xf32> to vector<16x32xf32>
    %22 = arith.addf %19, %21 : vector<16x32xf32>
    %c0_9 = arith.constant 0 : index
    %c0_10 = arith.constant 0 : index
    %23 = vector.load %arg4[%c0_9, %c0_10] : memref<32x64xf32, #tpu.memory_space<vmem>>, vector<32x64xf32>
    %cst_11 = arith.constant dense<0.000000e+00> : vector<16x64xf32>
    %24 = tpu.matmul %22, %23, %cst_11 {dimension_numbers = #tpu.dot_dimension_numbers<[1], [0], [0], [1], [0, 0, 1, 1], [], []>} : vector<16x32xf32>, vector<32x64xf32>, vector<16x64xf32> -> vector<16x64xf32>
    %c0_12 = arith.constant 0 : index
    %c0_13 = arith.constant 0 : index
    %25 = vector.load %arg5[%c0_12, %c0_13] : memref<1x64xf32, #tpu.memory_space<vmem>>, vector<1x64xf32>
    %26 = vector.broadcast %25 : vector<1x64xf32> to vector<16x64xf32>
    %27 = arith.addf %24, %26 : vector<16x64xf32>
    %cst_14 = arith.constant 5.000000e-01 : f32
    %28 = vector.broadcast %cst_14 : f32 to vector<16x64xf32>
    %29 = arith.mulf %28, %27 : vector<16x64xf32>
    %cst_15 = arith.constant 4.471500e-02 : f32
    %30 = vector.broadcast %cst_15 : f32 to vector<16x64xf32>
    %31 = arith.mulf %30, %27 : vector<16x64xf32>
    %32 = arith.mulf %31, %27 : vector<16x64xf32>
    %33 = arith.mulf %32, %27 : vector<16x64xf32>
    %34 = arith.addf %27, %33 : vector<16x64xf32>
    %cst_16 = arith.constant 0.797884583 : f32
    %35 = vector.broadcast %cst_16 : f32 to vector<16x64xf32>
    %36 = arith.mulf %35, %34 : vector<16x64xf32>
    %37 = math.tanh %36 : vector<16x64xf32>
    %cst_17 = arith.constant 1.000000e+00 : f32
    %38 = vector.broadcast %cst_17 : f32 to vector<16x64xf32>
    %39 = arith.addf %38, %37 : vector<16x64xf32>
    %40 = arith.mulf %29, %39 : vector<16x64xf32>
    %c0_18 = arith.constant 0 : index
    %c0_19 = arith.constant 0 : index
    %41 = vector.load %arg6[%c0_18, %c0_19] : memref<64x32xf32, #tpu.memory_space<vmem>>, vector<64x32xf32>
    %cst_20 = arith.constant dense<0.000000e+00> : vector<16x32xf32>
    %42 = tpu.matmul %40, %41, %cst_20 {dimension_numbers = #tpu.dot_dimension_numbers<[1], [0], [0], [1], [0, 0, 1, 1], [], []>} : vector<16x64xf32>, vector<64x32xf32>, vector<16x32xf32> -> vector<16x32xf32>
    %c0_21 = arith.constant 0 : index
    %c0_22 = arith.constant 0 : index
    %43 = vector.load %arg7[%c0_21, %c0_22] : memref<1x32xf32, #tpu.memory_space<vmem>>, vector<1x32xf32>
    %44 = vector.broadcast %43 : vector<1x32xf32> to vector<16x32xf32>
    %45 = arith.addf %42, %44 : vector<16x32xf32>
    %46 = arith.addf %45, %0 : vector<16x32xf32>
    %c0_23 = arith.constant 0 : index
    %c0_24 = arith.constant 0 : index
    %47 = vector.load %arg8[%c0_23, %c0_24] : memref<16x32xf32, #tpu.memory_space<vmem>>, vector<16x32xf32>
    tpu.vector_store %arg8[%c0_23, %c0_24], %46 {strides = array<i32>} : memref<16x32xf32, #tpu.memory_space<vmem>>, vector<16x32xf32>,
    return
  }
  func.func @transform_0(%arg0: i32) -> (i32, i32) {
    %c0_i32 = arith.constant 0 : i32
    %c0_i32_0 = arith.constant 0 : i32
    return %arg0, %c0_i32 : i32, i32
  }
  func.func @transform_1(%arg0: i32) -> (i32, i32) {
    %c0_i32 = arith.constant 0 : i32
    %c0_i32_0 = arith.constant 0 : i32
    %c0_i32_1 = arith.constant 0 : i32
    return %c0_i32, %c0_i32_0 : i32, i32
  }
  func.func @transform_2(%arg0: i32) -> (i32, i32) {
    %c0_i32 = arith.constant 0 : i32
    %c0_i32_0 = arith.constant 0 : i32
    %c0_i32_1 = arith.constant 0 : i32
    return %c0_i32, %c0_i32_0 : i32, i32
  }
  func.func @transform_3(%arg0: i32) -> (i32, i32) {
    %c0_i32 = arith.constant 0 : i32
    %c0_i32_0 = arith.constant 0 : i32
    %c0_i32_1 = arith.constant 0 : i32
    return %c0_i32, %c0_i32_0 : i32, i32
  }
  func.func @transform_4(%arg0: i32) -> (i32, i32) {
    %c0_i32 = arith.constant 0 : i32
    %c0_i32_0 = arith.constant 0 : i32
    %c0_i32_1 = arith.constant 0 : i32
    return %c0_i32, %c0_i32_0 : i32, i32
  }
  func.func @transform_5(%arg0: i32) -> (i32, i32) {
    %c0_i32 = arith.constant 0 : i32
    %c0_i32_0 = arith.constant 0 : i32
    %c0_i32_1 = arith.constant 0 : i32
    return %c0_i32, %c0_i32_0 : i32, i32
  }
  func.func @transform_6(%arg0: i32) -> (i32, i32) {
    %c0_i32 = arith.constant 0 : i32
    %c0_i32_0 = arith.constant 0 : i32
    %c0_i32_1 = arith.constant 0 : i32
    return %c0_i32, %c0_i32_0 : i32, i32
  }
  func.func @transform_7(%arg0: i32) -> (i32, i32) {
    %c0_i32 = arith.constant 0 : i32
    %c0_i32_0 = arith.constant 0 : i32
    return %arg0, %c0_i32 : i32, i32
  }
}

</mosaic_0001>

<llo_original>
// kernel: transformer_forward.9
$region0: #{transformer_forward.9}
  #allocation0 [shape = 'u32[]', space=smem, size = 0x4, offset = 0x4, fixed_abs, tag = 'smem constant byte address 0x4 - core index']
  #allocation1 [shape = 'u32[144,128]{1,0:T(1,128)}', space=vmem, size = 0x12000, scoped, tag = 'internal scratch']
  %s0 = inlined_call_operand.vmem [shape: f32[8,8,8], index: 0, kind: input, shape index: {}]
  %s1 = inlined_call_operand.vmem [shape: f32[8,8,8], index: 1, kind: input, shape index: {}]
  %s2 = inlined_call_operand.vmem [shape: f32[8,8,8], index: 2, kind: input, shape index: {}]
  %s3 = inlined_call_operand.vmem [shape: f32[8,8,8], index: 3, kind: output, shape index: {}]
  %s4 = sld [smem:[#allocation0]]
  $region45: #{transformer_forward.9} parent=0
    _
  %s6 = ssub.s32 1, %s4
  %s7 = scalar_select 0, %s6, %s4
  loop: start=0, step=1, limit=10
  $region2: #{transformer_forward.9} parent=0 // loop_pre_header
    _
  $region3: #{transformer_forward.9} parent=0 // loop_header
    %s9 = sphi 0, %s13
    %p10 = scmp.ge.s32.totalorder %s9, 10
    %s19 = sphi 0, %s21
    %s22 = sphi 0, %s19
    %s23 = sphi 0, %s22
    %s39 = sphi 0, %s23
    %s45 = sphi 0, %s47
    %s48 = sphi 0, %s45
    %s49 = sphi 0, %s48
    %s65 = sphi 0, %s49
    %s71 = sphi 0, %s73
    %s74 = sphi 0, %s71
    %s75 = sphi 0, %s74
    %s91 = sphi 0, %s75
    %s97 = sphi 0, %s99
    %s100 = sphi 0, %s97
    %s101 = sphi 0, %s100
    %s117 = sphi 0, %s101
  $region4: #{transformer_forward.9} parent=0 // loop_header_branch
    %12 = sbr.rel (%p10) target = $region8
  $region5: #{transformer_forward.9} parent=0 // loop_body
    %s14 = ssub.s32 %s9, 1
    %s15 = ssub.s32 %s9, 2
    %s16 = sadd.s32 %s9, 1
    %s17 = ssub.s32 %s9, %s16
    %p18 = scmp.eq.s32.totalorder %s17, 0
    %s20 = sadd.s32 %s19, 1
    %s21 = scalar_select %p18, %s19, %s20
    %p24 = pneg %p18
    %p25 = scmp.eq.s32.totalorder %s9, 7
    %p26 = por %p24, %p25
    %p27 = scmp.ne.s32.totalorder %s19, %s22
    %p28 = scmp.eq.s32.totalorder %s9, 0
    %p29 = por %p27, %p28
    %p30 = scmp.ne.s32.totalorder %s19, %s22
    %p31 = scmp.eq.s32.totalorder %s14, 7
    %p32 = por %p30, %p31
    %p33 = scmp.ne.s32.totalorder %s22, %s23
    %p34 = scmp.eq.s32.totalorder %s14, 0
    %p35 = por %p33, %p34
    %p36 = scmp.ne.s32.totalorder %s22, %s23
    %p37 = scmp.eq.s32.totalorder %s15, 7
    %p38 = por %p36, %p37
    %p40 = scmp.ne.s32.totalorder %s23, %s39
    %p41 = scmp.eq.s32.totalorder %s15, 0
    %p42 = por %p40, %p41
    %s43 = ssub.s32 %s9, %s16
    %p44 = scmp.eq.s32.totalorder %s43, 0
    %s46 = sadd.s32 %s45, 1
    %s47 = scalar_select %p44, %s45, %s46
    %p50 = pneg %p44
    %p51 = scmp.eq.s32.totalorder %s9, 7
    %p52 = por %p50, %p51
    %p53 = scmp.ne.s32.totalorder %s45, %s48
    %p54 = scmp.eq.s32.totalorder %s9, 0
    %p55 = por %p53, %p54
    %p56 = scmp.ne.s32.totalorder %s45, %s48
    %p57 = scmp.eq.s32.totalorder %s14, 7
    %p58 = por %p56, %p57
    %p59 = scmp.ne.s32.totalorder %s48, %s49
    %p60 = scmp.eq.s32.totalorder %s14, 0
    %p61 = por %p59, %p60
    %p62 = scmp.ne.s32.totalorder %s48, %s49
    %p63 = scmp.eq.s32.totalorder %s15, 7
    %p64 = por %p62, %p63
    %p66 = scmp.ne.s32.totalorder %s49, %s65
    %p67 = scmp.eq.s32.totalorder %s15, 0
    %p68 = por %p66, %p67
    %s69 = ssub.s32 %s9, %s16
    %p70 = scmp.eq.s32.totalorder %s69, 0
    %s72 = sadd.s32 %s71, 1
    %s73 = scalar_select %p70, %s71, %s72
    %p76 = pneg %p70
    %p77 = scmp.eq.s32.totalorder %s9, 7
    %p78 = por %p76, %p77
    %p79 = scmp.ne.s32.totalorder %s71, %s74
    %p80 = scmp.eq.s32.totalorder %s9, 0
    %p81 = por %p79, %p80
    %p82 = scmp.ne.s32.totalorder %s71, %s74
    %p83 = scmp.eq.s32.totalorder %s14, 7
    %p84 = por %p82, %p83
    %p85 = scmp.ne.s32.totalorder %s74, %s75
    %p86 = scmp.eq.s32.totalorder %s14, 0
    %p87 = por %p85, %p86
    %p88 = scmp.ne.s32.totalorder %s74, %s75
    %p89 = scmp.eq.s32.totalorder %s15, 7
    %p90 = por %p88, %p89
    %p92 = scmp.ne.s32.totalorder %s75, %s91
    %p93 = scmp.eq.s32.totalorder %s15, 0
    %p94 = por %p92, %p93
    %s95 = ssub.s32 %s9, %s16
    %p96 = scmp.eq.s32.totalorder %s95, 0
    %s98 = sadd.s32 %s97, 1
    %s99 = scalar_select %p96, %s97, %s98
    %p102 = pneg %p96
    %p103 = scmp.eq.s32.totalorder %s9, 7
    %p104 = por %p102, %p103
    %p105 = scmp.ne.s32.totalorder %s97, %s100
    %p106 = scmp.eq.s32.totalorder %s9, 0
    %p107 = por %p105, %p106
    %p108 = scmp.ne.s32.totalorder %s97, %s100
    %p109 = scmp.eq.s32.totalorder %s14, 7
    %p110 = por %p108, %p109
    %p111 = scmp.ne.s32.totalorder %s100, %s101
    %p112 = scmp.eq.s32.totalorder %s14, 0
    %p113 = por %p111, %p112
    %p114 = scmp.ne.s32.totalorder %s100, %s101
    %p115 = scmp.eq.s32.totalorder %s15, 7
    %p116 = por %p114, %p115
    %p118 = scmp.ne.s32.totalorder %s101, %s117
    %p119 = scmp.eq.s32.totalorder %s15, 0
    %p120 = por %p118, %p119
    %p121 = scmp.le.s32.totalorder 1, %s9
    %p122 = scmp.lt.s32.totalorder %s9, 9
    %p123 = pnand %p121, %p122
    %p124 = pneg %p123
    // Predicated region
    $region9: #{transformer_forward.9} parent=5 // pred_check
      _
    $region10: #{transformer_forward.9} parent=5 // pred_check_branch
      %126 = sbr.rel (%p123) target = $region12
    $region11: #{transformer_forward.9} parent=5 // pred_region
      %s127 = ssub.s32 %s9, 1
    $region12: #{transformer_forward.9} parent=5 // pred_fallthru
      _
    %p128 = scmp.lt.s32.totalorder %s9, 8
    // Predicated region
    $region13: #{transformer_forward.9} parent=5 // pred_check
      %p129 = pneg %p128
    $region14: #{transformer_forward.9} parent=5 // pred_check_branch
      %131 = sbr.rel (%p129) target = $region16
    $region15: #{transformer_forward.9} parent=5 // pred_region
      // Predicated region
      $region17: #{transformer_forward.9} parent=15 // pred_check
        %p132 = pneg %p29
      $region18: #{transformer_forward.9} parent=15 // pred_check_branch
        %134 = sbr.rel (%p132) target = $region20
      $region19: #{transformer_forward.9} parent=15 // pred_region
        %p135 = scmp.lt.s32.totalorder %s9, 7
        %s136 = scalar_select %p135, %s9, 7
        %s137 = smul.addr %s136, 8
        %s138 = scalar_lea.vmem %s0, %s137
      $region20: #{transformer_forward.9} parent=15 // pred_fallthru
        _
      // Predicated region
      $region21: #{transformer_forward.9} parent=15 // pred_check
        %p139 = pneg %p55
      $region22: #{transformer_forward.9} parent=15 // pred_check_branch
        %141 = sbr.rel (%p139) target = $region24
      $region23: #{transformer_forward.9} parent=15 // pred_region
        %p142 = scmp.lt.s32.totalorder %s9, 7
        %s143 = scalar_select %p142, %s9, 7
        %s144 = smul.addr %s143, 8
        %s145 = scalar_lea.vmem %s1, %s144
      $region24: #{transformer_forward.9} parent=15 // pred_fallthru
        _
      // Predicated region
      $region25: #{transformer_forward.9} parent=15 // pred_check
        %p146 = pneg %p81
      $region26: #{transformer_forward.9} parent=15 // pred_check_branch
        %148 = sbr.rel (%p146) target = $region28
      $region27: #{transformer_forward.9} parent=15 // pred_region
        %p149 = scmp.lt.s32.totalorder %s9, 7
        %s150 = scalar_select %p149, %s9, 7
        %s151 = smul.addr %s150, 8
        %s152 = scalar_lea.vmem %s2, %s151
      $region28: #{transformer_forward.9} parent=15 // pred_fallthru
        _
    $region16: #{transformer_forward.9} parent=5 // pred_fallthru
      _
    %p153 = scmp.le.s32.totalorder 1, %s9
    %p154 = scmp.lt.s32.totalorder %s9, 9
    %p155 = pnand %p153, %p154
    %p156 = pneg %p155
    // Predicated region
    $region29: #{transformer_forward.9} parent=5 // pred_check
      _
    $region30: #{transformer_forward.9} parent=5 // pred_check_branch
      %158 = sbr.rel (%p155) target = $region32
    $region31: #{transformer_forward.9} parent=5 // pred_region
      %s159 = ssub.s32 %s9, 1
      %p160 = scmp.lt.s32.totalorder %s14, 7
      %s161 = scalar_select %p160, %s14, 7
      %s162 = smul.addr %s161, 8
      %s163 = scalar_lea.vmem %s0, %s162
      %p164 = pneg %p35
      %p165 = pneg %p32
      %p166 = scmp.lt.s32.totalorder %s14, 7
      %s167 = scalar_select %p166, %s14, 7
      %s168 = smul.addr %s167, 8
      %s169 = scalar_lea.vmem %s1, %s168
      %p170 = pneg %p61
      %p171 = pneg %p58
      %p172 = scmp.lt.s32.totalorder %s14, 7
      %s173 = scalar_select %p172, %s14, 7
      %s174 = smul.addr %s173, 8
      %s175 = scalar_lea.vmem %s2, %s174
      %p176 = pneg %p87
      %p177 = pneg %p84
      %p178 = pneg %p113
      %p179 = pneg %p110
      %p180 = scmp.lt.s32.totalorder %s14, 7
      %s181 = scalar_select %p180, %s14, 7
      %s182 = smul.addr %s181, 8
      %s183 = scalar_lea.vmem %s3, %s182
      %p184 = scmp.lt.s32.totalorder %s14, 7
      %s185 = scalar_select %p184, %s14, 7
      %s186 = smul.addr %s185, 8
      %s187 = scalar_lea.vmem %s0, %s186
      %p188 = scmp.lt.s32.totalorder %s14, 7
      %s189 = scalar_select %p188, %s14, 7
      %s190 = smul.addr %s189, 8
      %s191 = scalar_lea.vmem %s1, %s190
      %p192 = scmp.lt.s32.totalorder %s14, 7
      %s193 = scalar_select %p192, %s14, 7
      %s194 = smul.addr %s193, 8
      %s195 = scalar_lea.vmem %s2, %s194
      %p196 = scmp.lt.s32.totalorder %s14, 7
      %s197 = scalar_select %p196, %s14, 7
      %s198 = smul.addr %s197, 8
      %s199 = scalar_lea.vmem %s3, %s198
      %v200 = vld [vmem:[%s187] sm:$0xff]
      %v201 = vld [vmem:[%s191] sm:$0xff]
      %vm202 = vcmask 64512
      %v204 = vsel %vm202, %v200, 0
      %v207 = vsel %vm202, %v201, 0
      %209 = vmatprep.subr.mxu0 0.0
      %210 = vmatpush1.xpose.msra.mxu0 0.0
      %211 = vmatprep.subr.mxu0 0.0
      %212 = vmatpush1.xpose.msra.mxu0 0.0
      %213 = vmatprep.subr.mxu0 0.0
      %214 = vmatpush1.xpose.msra.mxu0 0.0
      %215 = vmatprep.subr.mxu0 0.0
      %216 = vmatpush1.xpose.msra.mxu0 0.0
      %217 = vmatprep.subr.mxu0 0.0
      %218 = vmatpush1.xpose.msra.mxu0 0.0
      %219 = vmatprep.subr.mxu0 0.0
      %220 = vmatpush1.xpose.msra.mxu0 0.0
      %221 = vmatprep.subr.mxu0 0.0
      %222 = vmatpush1.xpose.msra.mxu0 0.0
      %223 = vmatprep.subr.mxu0 0.0
      %224 = vmatpush1.xpose.msra.mxu0 0.0
      %225 = vmatprep.subr.mxu0 0.0
      %226 = vmatpush1.xpose.msra.mxu0 0.0
      %227 = vmatprep.subr.mxu0 0.0
      %228 = vmatpush1.xpose.msra.mxu0 0.0
      %229 = vmatprep.subr.mxu0 0.0
      %230 = vmatpush1.xpose.msra.mxu0 0.0
      %231 = vmatprep.subr.mxu0 0.0
      %232 = vmatpush1.xpose.msra.mxu0 0.0
      %233 = vmatprep.subr.mxu0 0.0
      %234 = vmatpush1.xpose.msra.mxu0 0.0
      %235 = vmatprep.subr.mxu0 0.0
      %236 = vmatpush1.xpose.msra.mxu0 0.0
      %237 = vmatprep.subr.mxu0 0.0
      %238 = vmatpush1.xpose.msra.mxu0 0.0
      %239 = vmatprep.subr.mxu0 0.0
      %240 = vmatpush1.xpose.msra.mxu0 %v207
      %241 = vmatprep.subr.mxu0 0.0
      %242 = vmatpush2.xpose.msra.mxu0 0.0
      %243 = vmatprep.subr.mxu0 0.0
      %244 = vmatpush2.xpose.msra.mxu0 0.0
      %245 = vmatprep.subr.mxu0 0.0
      %246 = vmatpush2.xpose.msra.mxu0 0.0
      %247 = vmatprep.subr.mxu0 0.0
      %248 = vmatpush2.xpose.msra.mxu0 0.0
      %249 = vmatprep.subr.mxu0 0.0
      %250 = vmatpush2.xpose.msra.mxu0 0.0
      %251 = vmatprep.subr.mxu0 0.0
      %252 = vmatpush2.xpose.msra.mxu0 0.0
      %253 = vmatprep.subr.mxu0 0.0
      %254 = vmatpush2.xpose.msra.mxu0 0.0
      %255 = vmatprep.subr.mxu0 0.0
      %256 = vmatpush2.xpose.msra.mxu0 0.0
      %257 = vmatprep.subr.mxu0 0.0
      %258 = vmatpush2.xpose.msra.mxu0 0.0
      %259 = vmatprep.subr.mxu0 0.0
      %260 = vmatpush2.xpose.msra.mxu0 0.0
      %261 = vmatprep.subr.mxu0 0.0
      %262 = vmatpush2.xpose.msra.mxu0 0.0
      %263 = vmatprep.subr.mxu0 0.0
      %264 = vmatpush2.xpose.msra.mxu0 0.0
      %265 = vmatprep.subr.mxu0 0.0
      %266 = vmatpush2.xpose.msra.mxu0 0.0
      %267 = vmatprep.subr.mxu0 0.0
      %268 = vmatpush2.xpose.msra.mxu0 0.0
      %269 = vmatprep.subr.mxu0 0.0
      %270 = vmatpush2.xpose.msra.mxu0 0.0
      %271 = vmatprep.subr.mxu0 0.0
      %272 = vmatpush2.xpose.msra.mxu0 0.0
      %273 = vmatprep.mubr.f32.mxu0 0.0
      %274 = vmatmul.mubr.f32.gmra.mxu0 %v204
      %v275 = vpop.f32.mrf.mxu0
      %v276 = vadd.f32 0.0, %v275
      %v277 = vpop.f32.mrf.mxu0
      %278 = vdwg.mxu0
      %v279 = vmul.f32 %v276, 0.35355338
      %v280 = vsel %vm202, %v279, -inf
      %281 = vmax.xlane.f32.xlu0 %v280
      %v282 = vpop.xlane.xlu0 %281
      %v283 = vsub.f32 %v279, %v282
      %v284 = vmul.f32 %v283, 1.442695
      %v285 = vpow.pop %v284
      %v286 = vsel %vm202, %v285, 0.0
      %287 = vadd.xlane.f32.xlu0 %v286
      %v288 = vpop.xlane.xlu0 %287
      %v289 = vrcp.pop %v288
      %v290 = vmul.f32 %v285, %v289
      %v291 = vld [vmem:[%s195] sm:$0xff]
      %v293 = vsel %vm202, %v290, 0
      %295 = vmatprep.subr.mxu0 0.0
      %296 = vmatpush1.msra.mxu0 0.0
      %297 = vmatprep.subr.mxu0 0.0
      %298 = vmatpush1.msra.mxu0 0.0
      %299 = vmatprep.subr.mxu0 0.0
      %300 = vmatpush1.msra.mxu0 0.0
      %301 = vmatprep.subr.mxu0 0.0
      %302 = vmatpush1.msra.mxu0 0.0
      %303 = vmatprep.subr.mxu0 0.0
      %304 = vmatpush1.msra.mxu0 0.0
      %305 = vmatprep.subr.mxu0 0.0
      %306 = vmatpush1.msra.mxu0 0.0
      %307 = vmatprep.subr.mxu0 0.0
      %308 = vmatpush1.msra.mxu0 0.0
      %309 = vmatprep.subr.mxu0 0.0
      %310 = vmatpush1.msra.mxu0 0.0
      %311 = vmatprep.subr.mxu0 0.0
      %312 = vmatpush1.msra.mxu0 0.0
      %313 = vmatprep.subr.mxu0 0.0
      %314 = vmatpush1.msra.mxu0 0.0
      %315 = vmatprep.subr.mxu0 0.0
      %316 = vmatpush1.msra.mxu0 0.0
      %317 = vmatprep.subr.mxu0 0.0
      %318 = vmatpush1.msra.mxu0 0.0
      %319 = vmatprep.subr.mxu0 0.0
      %320 = vmatpush1.msra.mxu0 0.0
      %321 = vmatprep.subr.mxu0 0.0
      %322 = vmatpush1.msra.mxu0 0.0
      %323 = vmatprep.subr.mxu0 0.0
      %324 = vmatpush1.msra.mxu0 0.0
      %325 = vmatprep.subr.mxu0 0.0
      %326 = vmatpush1.msra.mxu0 %v291
      %327 = vmatprep.subr.mxu0 0.0
      %328 = vmatpush2.msra.mxu0 0.0
      %329 = vmatprep.subr.mxu0 0.0
      %330 = vmatpush2.msra.mxu0 0.0
      %331 = vmatprep.subr.mxu0 0.0
      %332 = vmatpush2.msra.mxu0 0.0
      %333 = vmatprep.subr.mxu0 0.0
      %334 = vmatpush2.msra.mxu0 0.0
      %335 = vmatprep.subr.mxu0 0.0
      %336 = vmatpush2.msra.mxu0 0.0
      %337 = vmatprep.subr.mxu0 0.0
      %338 = vmatpush2.msra.mxu0 0.0
      %339 = vmatprep.subr.mxu0 0.0
      %340 = vmatpush2.msra.mxu0 0.0
      %341 = vmatprep.subr.mxu0 0.0
      %342 = vmatpush2.msra.mxu0 0.0
      %343 = vmatprep.subr.mxu0 0.0
      %344 = vmatpush2.msra.mxu0 0.0
      %345 = vmatprep.subr.mxu0 0.0
      %346 = vmatpush2.msra.mxu0 0.0
      %347 = vmatprep.subr.mxu0 0.0
      %348 = vmatpush2.msra.mxu0 0.0
      %349 = vmatprep.subr.mxu0 0.0
      %350 = vmatpush2.msra.mxu0 0.0
      %351 = vmatprep.subr.mxu0 0.0
      %352 = vmatpush2.msra.mxu0 0.0
      %353 = vmatprep.subr.mxu0 0.0
      %354 = vmatpush2.msra.mxu0 0.0
      %355 = vmatprep.subr.mxu0 0.0
      %356 = vmatpush2.msra.mxu0 0.0
      %357 = vmatprep.subr.mxu0 0.0
      %358 = vmatpush2.msra.mxu0 0.0
      %359 = vmatprep.mubr.f32.mxu0 0.0
      %360 = vmatmul.mubr.f32.gmra.mxu0 %v293
      %v361 = vpop.f32.mrf.mxu0
      %v362 = vadd.f32 0.0, %v361
      %v363 = vpop.f32.mrf.mxu0
      %364 = vdwg.mxu0
      %365 = vst.msk [vmem:[%s199] sm:$0xff] %vm202, %v362
      %p366 = scmp.lt.s32.totalorder %s14, 7
      %s367 = scalar_select %p366, %s14, 7
      %s368 = smul.addr %s367, 8
      %s369 = scalar_lea.vmem %s3, %s368
      // Predicated region
      $region33: #{transformer_forward.9} parent=31 // pred_check
        %p370 = pneg %p110
      $region34: #{transformer_forward.9} parent=31 // pred_check_branch
        %372 = sbr.rel (%p370) target = $region36
      $region35: #{transformer_forward.9} parent=31 // pred_region
        _
      $region36: #{transformer_forward.9} parent=31 // pred_fallthru
        _
    $region32: #{transformer_forward.9} parent=5 // pred_fallthru
      _
    %p373 = scmp.le.s32.totalorder 2, %s9
    // Predicated region
    $region37: #{transformer_forward.9} parent=5 // pred_check
      %p374 = pneg %p373
    $region38: #{transformer_forward.9} parent=5 // pred_check_branch
      %376 = sbr.rel (%p374) target = $region40
    $region39: #{transformer_forward.9} parent=5 // pred_region
      %s377 = ssub.s32 %s9, 2
      // Predicated region
      $region41: #{transformer_forward.9} parent=39 // pred_check
        %p378 = pneg %p116
      $region42: #{transformer_forward.9} parent=39 // pred_check_branch
        %380 = sbr.rel (%p378) target = $region44
      $region43: #{transformer_forward.9} parent=39 // pred_region
        %p381 = scmp.lt.s32.totalorder %s15, 7
        %s382 = scalar_select %p381, %s15, 7
        %s383 = smul.addr %s382, 8
        %s384 = scalar_lea.vmem %s3, %s383
      $region44: #{transformer_forward.9} parent=39 // pred_fallthru
        _
    $region40: #{transformer_forward.9} parent=5 // pred_fallthru
      _
  $region6: #{transformer_forward.9} parent=0 // loop_footer
    %s13 = sadd.s32 1, %s9
  $region7: #{transformer_forward.9} parent=0 // loop_footer_branch
    %8 = sbr.rel target = $region3
  $region8: #{transformer_forward.9} parent=0 // loop_exit
    _

// kernel: transformer_forward.8
$region0: #{transformer_forward.8}
  #allocation0 [shape = 'u32[]', space=smem, size = 0x4, offset = 0x4, fixed_abs, tag = 'smem constant byte address 0x4 - core index']
  #allocation1 [shape = 'u32[144,128]{1,0:T(1,128)}', space=vmem, size = 0x12000, scoped, tag = 'internal scratch']
  %s0 = inlined_call_operand.vmem [shape: f32[16,32], index: 0, kind: input, shape index: {}]
  %s1 = inlined_call_operand.vmem [shape: f32[1,32], index: 1, kind: input, shape index: {}]
  %s2 = inlined_call_operand.vmem [shape: f32[1,32], index: 2, kind: input, shape index: {}]
  %s3 = inlined_call_operand.hbm [shape: f32[32,96], index: 3, kind: input, shape index: {}]
  %s4 = inlined_call_operand.vmem [shape: f32[16,96], index: 4, kind: output, shape index: {}]
  %s5 = sld [smem:[#allocation0]]
  $region30: #{transformer_forward.8} parent=0
    _
  %s7 = ssub.s32 1, %s5
  %s8 = scalar_select 0, %s7, %s5
  $region1: #{transformer_forward.8} parent=0
    #allocation2 [shape = 'u8[16384]{0}', space=vmem, size = 0x4000, scoped, tag = 'input window, operand 3, single buffered']
    #allocation3 [shape = 's32[1]{0}', space=sflag, size = 0x4, scoped, tag = 'scoped memory for transformer_forward.8']
    %9 = vsyncpa [#allocation3], 0
    // Predicated region
    $region2: #{transformer_forward.8} parent=1 // pred_check
      _
    $region3: #{transformer_forward.8} parent=1 // pred_check_branch
      %11 = sbr.rel (0) target = $region5
    $region4: #{transformer_forward.8} parent=1 // pred_region
      _
    $region5: #{transformer_forward.8} parent=1 // pred_fallthru
      _
    // Predicated region
    $region6: #{transformer_forward.8} parent=1 // pred_check
      _
    $region7: #{transformer_forward.8} parent=1 // pred_check_branch
      %13 = sbr.rel (0) target = $region9
    $region8: #{transformer_forward.8} parent=1 // pred_region
      _
    $region9: #{transformer_forward.8} parent=1 // pred_fallthru
      _
    // Predicated region
    $region10: #{transformer_forward.8} parent=1 // pred_check
      _
    $region11: #{transformer_forward.8} parent=1 // pred_check_branch
      %15 = sbr.rel (0) target = $region13
    $region12: #{transformer_forward.8} parent=1 // pred_region
      _
    $region13: #{transformer_forward.8} parent=1 // pred_fallthru
      _
    // Predicated region
    $region14: #{transformer_forward.8} parent=1 // pred_check
      _
    $region15: #{transformer_forward.8} parent=1 // pred_check_branch
      %17 = sbr.rel (0) target = $region17
    $region16: #{transformer_forward.8} parent=1 // pred_region
      %s19 = ssub.s32 512, 512
      %20 = vsyncadd [#allocation3], %s19
      %s21 = sshll.u32 [#allocation2], 4
      %s22 = int_to_ptr.vmem [resolvable:$true] %s21
      %27 = dma.hbm_to_vmem [thread:$0]  %s3, 512, %s22, [#allocation3], 128, 128, 8
    $region17: #{transformer_forward.8} parent=1 // pred_fallthru
      _
    // Predicated region
    $region18: #{transformer_forward.8} parent=1 // pred_check
      _
    $region19: #{transformer_forward.8} parent=1 // pred_check_branch
      %29 = sbr.rel (0) target = $region21
    $region20: #{transformer_forward.8} parent=1 // pred_region
      %30 = dma.done [#allocation3], 512
    $region21: #{transformer_forward.8} parent=1 // pred_fallthru
      _
    %v31 = vld [vmem:[%s0] sm:$0xff]
    %v32 = vld [vmem:[%s0 + $0x8] sm:$0xff]
    %vm33 = vcmask 261120
    %v34 = vsel %vm33, %v31, 0.0
    %35 = vadd.xlane.f32.xlu0 %v34
    %v36 = vpop.xlane.xlu0 %35
    %v37 = vsel %vm33, %v32, 0.0
    %38 = vadd.xlane.f32.xlu0 %v37
    %v39 = vpop.xlane.xlu0 %38
    %v40 = vrcp.pop 32.0
    %v41 = vmul.f32 %v36, %v40
    %v42 = vmul.f32 %v39, %v40
    %v43 = vsub.f32 %v31, %v41
    %v44 = vsub.f32 %v32, %v42
    %v45 = vmul.f32 %v43, %v43
    %v46 = vmul.f32 %v44, %v44
    %v47 = vsel %vm33, %v45, 0.0
    %48 = vadd.xlane.f32.xlu0 %v47
    %v49 = vpop.xlane.xlu0 %48
    %v50 = vsel %vm33, %v46, 0.0
    %51 = vadd.xlane.f32.xlu0 %v50
    %v52 = vpop.xlane.xlu0 %51
    %v53 = vmul.f32 %v49, %v40
    %v54 = vmul.f32 %v52, %v40
    %v55 = vadd.f32 %v53, 1e-05
    %v56 = vadd.f32 %v54, 1e-05
    %v57 = vrsqrt.pop %v55
    %v58 = vrsqrt.pop %v56
    %v59 = vmul.f32 %v43, %v57
    %v60 = vmul.f32 %v44, %v58
    %v61 = vld [vmem:[%s1] sm:$0x1]
    %v63 = vlaneseq
    %v64 = vshrl.u32 %v63, 7
    %v65 = vsub.s32 0, %v64
    %v66 = vrot.slane %v61, %v65
    %v68 = vmul.f32 %v59, %v66
    %v69 = vmul.f32 %v60, %v66
    %v70 = vld [vmem:[%s2] sm:$0x1]
    %v72 = vlaneseq
    %v73 = vshrl.u32 %v72, 7
    %v74 = vsub.s32 0, %v73
    %v75 = vrot.slane %v70, %v74
    %v77 = vadd.f32 %v68, %v75
    %v78 = vadd.f32 %v69, %v75
    %v79 = vld [vmem:[#allocation2] sm:$0xff]
    %v80 = vld [vmem:[#allocation2 + $0x8] sm:$0xff]
    %v81 = vld [vmem:[#allocation2 + $0x10] sm:$0xff]
    %v82 = vld [vmem:[#allocation2 + $0x18] sm:$0xff]
    %v84 = vsel %vm33, %v77, 0
    %v87 = vsel %vm33, %v78, 0
    %89 = vmatprep.subr.mxu0 0.0
    %90 = vmatpush1.msra.mxu0 0.0
    %91 = vmatprep.subr.mxu0 0.0
    %92 = vmatpush1.msra.mxu0 0.0
    %93 = vmatprep.subr.mxu0 0.0
    %94 = vmatpush1.msra.mxu0 0.0
    %95 = vmatprep.subr.mxu0 0.0
    %96 = vmatpush1.msra.mxu0 0.0
    %97 = vmatprep.subr.mxu0 0.0
    %98 = vmatpush1.msra.mxu0 0.0
    %99 = vmatprep.subr.mxu0 0.0
    %100 = vmatpush1.msra.mxu0 0.0
    %101 = vmatprep.subr.mxu0 0.0
    %102 = vmatpush1.msra.mxu0 0.0
    %103 = vmatprep.subr.mxu0 0.0
    %104 = vmatpush1.msra.mxu0 0.0
    %105 = vmatprep.subr.mxu0 0.0
    %106 = vmatpush1.msra.mxu0 0.0
    %107 = vmatprep.subr.mxu0 0.0
    %108 = vmatpush1.msra.mxu0 0.0
    %109 = vmatprep.subr.mxu0 0.0
    %110 = vmatpush1.msra.mxu0 0.0
    %111 = vmatprep.subr.mxu0 0.0
    %112 = vmatpush1.msra.mxu0 0.0
    %113 = vmatprep.subr.mxu0 0.0
    %114 = vmatpush1.msra.mxu0 %v82
    %115 = vmatprep.subr.mxu0 0.0
    %116 = vmatpush1.msra.mxu0 %v81
    %117 = vmatprep.subr.mxu0 0.0
    %118 = vmatpush1.msra.mxu0 %v80
    %119 = vmatprep.subr.mxu0 0.0
    %120 = vmatpush1.msra.mxu0 %v79
    %121 = vmatprep.subr.mxu0 0.0
    %122 = vmatpush2.msra.mxu0 0.0
    %123 = vmatprep.subr.mxu0 0.0
    %124 = vmatpush2.msra.mxu0 0.0
    %125 = vmatprep.subr.mxu0 0.0
    %126 = vmatpush2.msra.mxu0 0.0
    %127 = vmatprep.subr.mxu0 0.0
    %128 = vmatpush2.msra.mxu0 0.0
    %129 = vmatprep.subr.mxu0 0.0
    %130 = vmatpush2.msra.mxu0 0.0
    %131 = vmatprep.subr.mxu0 0.0
    %132 = vmatpush2.msra.mxu0 0.0
    %133 = vmatprep.subr.mxu0 0.0
    %134 = vmatpush2.msra.mxu0 0.0
    %135 = vmatprep.subr.mxu0 0.0
    %136 = vmatpush2.msra.mxu0 0.0
    %137 = vmatprep.subr.mxu0 0.0
    %138 = vmatpush2.msra.mxu0 0.0
    %139 = vmatprep.subr.mxu0 0.0
    %140 = vmatpush2.msra.mxu0 0.0
    %141 = vmatprep.subr.mxu0 0.0
    %142 = vmatpush2.msra.mxu0 0.0
    %143 = vmatprep.subr.mxu0 0.0
    %144 = vmatpush2.msra.mxu0 0.0
    %145 = vmatprep.subr.mxu0 0.0
    %146 = vmatpush2.msra.mxu0 0.0
    %147 = vmatprep.subr.mxu0 0.0
    %148 = vmatpush2.msra.mxu0 0.0
    %149 = vmatprep.subr.mxu0 0.0
    %150 = vmatpush2.msra.mxu0 0.0
    %151 = vmatprep.subr.mxu0 0.0
    %152 = vmatpush2.msra.mxu0 0.0
    %153 = vmatprep.mubr.f32.mxu0 0.0
    %154 = vmatmul.mubr.f32.gmra.mxu0 %v84
    %v155 = vpop.f32.mrf.mxu0
    %v156 = vadd.f32 0.0, %v155
    %v157 = vpop.f32.mrf.mxu0
    %158 = vmatprep.mubr.f32.mxu0 0.0
    %159 = vmatmul.mubr.f32.gmra.mxu0 %v87
    %v160 = vpop.f32.mrf.mxu0
    %v161 = vadd.f32 0.0, %v160
    %v162 = vpop.f32.mrf.mxu0
    %163 = vdwg.mxu0
    %vm164 = vcmask 785408
    %165 = vst.msk [vmem:[%s4] sm:$0xff] %vm164, %v156
    %166 = vst.msk [vmem:[%s4 + $0x8] sm:$0xff] %vm164, %v161
    // Predicated region
    $region22: #{transformer_forward.8} parent=1 // pred_check
      _
    $region23: #{transformer_forward.8} parent=1 // pred_check_branch
      %168 = sbr.rel (0) target = $region25
    $region24: #{transformer_forward.8} parent=1 // pred_region
      _
    $region25: #{transformer_forward.8} parent=1 // pred_fallthru
      _
    // Predicated region
    $region26: #{transformer_forward.8} parent=1 // pred_check
      _
    $region27: #{transformer_forward.8} parent=1 // pred_check_branch
      %170 = sbr.rel (0) target = $region29
    $region28: #{transformer_forward.8} parent=1 // pred_region
      _
    $region29: #{transformer_forward.8} parent=1 // pred_fallthru
      _
    %171 = vsyncpa [#allocation3], 1

// kernel: transformer_forward.10
$region0: #{transformer_forward.10}
  #allocation0 [shape = 'u32[]', space=smem, size = 0x4, offset = 0x4, fixed_abs, tag = 'smem constant byte address 0x4 - core index']
  #allocation1 [shape = 'u32[144,128]{1,0:T(1,128)}', space=vmem, size = 0x12000, scoped, tag = 'internal scratch']
  %s0 = inlined_call_operand.vmem [shape: f32[16,32], index: 0, kind: input, shape index: {}]
  %s1 = inlined_call_operand.vmem [shape: f32[16,32], index: 1, kind: input, shape index: {}]
  %s2 = inlined_call_operand.vmem [shape: f32[32,32], index: 2, kind: input, shape index: {}]
  %s3 = inlined_call_operand.vmem [shape: f32[1,32], index: 3, kind: input, shape index: {}]
  %s4 = inlined_call_operand.vmem [shape: f32[16,32], index: 4, kind: output, shape index: {}]
  %s5 = sld [smem:[#allocation0]]
  $region26: #{transformer_forward.10} parent=0
    _
  %s7 = ssub.s32 1, %s5
  %s8 = scalar_select 0, %s7, %s5
  // Predicated region
  $region2: #{transformer_forward.10} parent=0 // pred_check
    _
  $region3: #{transformer_forward.10} parent=0 // pred_check_branch
    %10 = sbr.rel (0) target = $region5
  $region4: #{transformer_forward.10} parent=0 // pred_region
    _
  $region5: #{transformer_forward.10} parent=0 // pred_fallthru
    _
  // Predicated region
  $region6: #{transformer_forward.10} parent=0 // pred_check
    _
  $region7: #{transformer_forward.10} parent=0 // pred_check_branch
    %12 = sbr.rel (0) target = $region9
  $region8: #{transformer_forward.10} parent=0 // pred_region
    _
  $region9: #{transformer_forward.10} parent=0 // pred_fallthru
    _
  // Predicated region
  $region10: #{transformer_forward.10} parent=0 // pred_check
    _
  $region11: #{transformer_forward.10} parent=0 // pred_check_branch
    %14 = sbr.rel (0) target = $region13
  $region12: #{transformer_forward.10} parent=0 // pred_region
    _
  $region13: #{transformer_forward.10} parent=0 // pred_fallthru
    _
  // Predicated region
  $region14: #{transformer_forward.10} parent=0 // pred_check
    _
  $region15: #{transformer_forward.10} parent=0 // pred_check_branch
    %16 = sbr.rel (0) target = $region17
  $region16: #{transformer_forward.10} parent=0 // pred_region
    _
  $region17: #{transformer_forward.10} parent=0 // pred_fallthru
    _
  %v17 = vld [vmem:[%s0] sm:$0xff]
  %v18 = vld [vmem:[%s0 + $0x8] sm:$0xff]
  %v19 = vld [vmem:[%s2] sm:$0xff]
  %v20 = vld [vmem:[%s2 + $0x8] sm:$0xff]
  %v21 = vld [vmem:[%s2 + $0x10] sm:$0xff]
  %v22 = vld [vmem:[%s2 + $0x18] sm:$0xff]
  %v23 = vld [vmem:[%s3] sm:$0x1]
  %v25 = vlaneseq
  %v26 = vshrl.u32 %v25, 7
  %v27 = vsub.s32 0, %v26
  %v28 = vrot.slane %v23, %v27
  %vm30 = vcmask 261120
  %v32 = vsel %vm30, %v17, 0
  %v35 = vsel %vm30, %v18, 0
  %37 = vmatprep.subr.mxu0 0.0
  %38 = vmatpush1.msra.mxu0 0.0
  %39 = vmatprep.subr.mxu0 0.0
  %40 = vmatpush1.msra.mxu0 0.0
  %41 = vmatprep.subr.mxu0 0.0
  %42 = vmatpush1.msra.mxu0 0.0
  %43 = vmatprep.subr.mxu0 0.0
  %44 = vmatpush1.msra.mxu0 0.0
  %45 = vmatprep.subr.mxu0 0.0
  %46 = vmatpush1.msra.mxu0 0.0
  %47 = vmatprep.subr.mxu0 0.0
  %48 = vmatpush1.msra.mxu0 0.0
  %49 = vmatprep.subr.mxu0 0.0
  %50 = vmatpush1.msra.mxu0 0.0
  %51 = vmatprep.subr.mxu0 0.0
  %52 = vmatpush1.msra.mxu0 0.0
  %53 = vmatprep.subr.mxu0 0.0
  %54 = vmatpush1.msra.mxu0 0.0
  %55 = vmatprep.subr.mxu0 0.0
  %56 = vmatpush1.msra.mxu0 0.0
  %57 = vmatprep.subr.mxu0 0.0
  %58 = vmatpush1.msra.mxu0 0.0
  %59 = vmatprep.subr.mxu0 0.0
  %60 = vmatpush1.msra.mxu0 0.0
  %61 = vmatprep.subr.mxu0 0.0
  %62 = vmatpush1.msra.mxu0 %v22
  %63 = vmatprep.subr.mxu0 0.0
  %64 = vmatpush1.msra.mxu0 %v21
  %65 = vmatprep.subr.mxu0 0.0
  %66 = vmatpush1.msra.mxu0 %v20
  %67 = vmatprep.subr.mxu0 0.0
  %68 = vmatpush1.msra.mxu0 %v19
  %69 = vmatprep.subr.mxu0 0.0
  %70 = vmatpush2.msra.mxu0 0.0
  %71 = vmatprep.subr.mxu0 0.0
  %72 = vmatpush2.msra.mxu0 0.0
  %73 = vmatprep.subr.mxu0 0.0
  %74 = vmatpush2.msra.mxu0 0.0
  %75 = vmatprep.subr.mxu0 0.0
  %76 = vmatpush2.msra.mxu0 0.0
  %77 = vmatprep.subr.mxu0 0.0
  %78 = vmatpush2.msra.mxu0 0.0
  %79 = vmatprep.subr.mxu0 0.0
  %80 = vmatpush2.msra.mxu0 0.0
  %81 = vmatprep.subr.mxu0 0.0
  %82 = vmatpush2.msra.mxu0 0.0
  %83 = vmatprep.subr.mxu0 0.0
  %84 = vmatpush2.msra.mxu0 0.0
  %85 = vmatprep.subr.mxu0 0.0
  %86 = vmatpush2.msra.mxu0 0.0
  %87 = vmatprep.subr.mxu0 0.0
  %88 = vmatpush2.msra.mxu0 0.0
  %89 = vmatprep.subr.mxu0 0.0
  %90 = vmatpush2.msra.mxu0 0.0
  %91 = vmatprep.subr.mxu0 0.0
  %92 = vmatpush2.msra.mxu0 0.0
  %93 = vmatprep.subr.mxu0 0.0
  %94 = vmatpush2.msra.mxu0 0.0
  %95 = vmatprep.subr.mxu0 0.0
  %96 = vmatpush2.msra.mxu0 0.0
  %97 = vmatprep.subr.mxu0 0.0
  %98 = vmatpush2.msra.mxu0 0.0
  %99 = vmatprep.subr.mxu0 0.0
  %100 = vmatpush2.msra.mxu0 0.0
  %101 = vmatprep.mubr.f32.mxu0 0.0
  %102 = vmatmul.mubr.f32.gmra.mxu0 %v32
  %v103 = vpop.f32.mrf.mxu0
  %v104 = vadd.f32 %v28, %v103
  %v105 = vpop.f32.mrf.mxu0
  %106 = vmatprep.mubr.f32.mxu0 0.0
  %107 = vmatmul.mubr.f32.gmra.mxu0 %v35
  %v108 = vpop.f32.mrf.mxu0
  %v109 = vadd.f32 %v28, %v108
  %v110 = vpop.f32.mrf.mxu0
  %111 = vdwg.mxu0
  %v112 = vld [vmem:[%s1] sm:$0xff]
  %v113 = vld [vmem:[%s1 + $0x8] sm:$0xff]
  %v114 = vadd.f32 %v104, %v112
  %v115 = vadd.f32 %v109, %v113
  %116 = vst.msk [vmem:[%s4] sm:$0xff] %vm30, %v114
  %117 = vst.msk [vmem:[%s4 + $0x8] sm:$0xff] %vm30, %v115
  // Predicated region
  $region18: #{transformer_forward.10} parent=0 // pred_check
    _
  $region19: #{transformer_forward.10} parent=0 // pred_check_branch
    %119 = sbr.rel (0) target = $region21
  $region20: #{transformer_forward.10} parent=0 // pred_region
    _
  $region21: #{transformer_forward.10} parent=0 // pred_fallthru
    _
  // Predicated region
  $region22: #{transformer_forward.10} parent=0 // pred_check
    _
  $region23: #{transformer_forward.10} parent=0 // pred_check_branch
    %121 = sbr.rel (0) target = $region25
  $region24: #{transformer_forward.10} parent=0 // pred_region
    _
  $region25: #{transformer_forward.10} parent=0 // pred_fallthru
    _

// kernel: transformer_forward.11
$region0: #{transformer_forward.11}
  #allocation0 [shape = 'u32[]', space=smem, size = 0x4, offset = 0x4, fixed_abs, tag = 'smem constant byte address 0x4 - core index']
  #allocation1 [shape = 'u32[144,128]{1,0:T(1,128)}', space=vmem, size = 0x12000, scoped, tag = 'internal scratch']
  %s0 = inlined_call_operand.vmem [shape: f32[16,32], index: 0, kind: input, shape index: {}]
  %s1 = inlined_call_operand.vmem [shape: f32[1,32], index: 1, kind: input, shape index: {}]
  %s2 = inlined_call_operand.vmem [shape: f32[1,32], index: 2, kind: input, shape index: {}]
  %s3 = inlined_call_operand.vmem [shape: f32[32,64], index: 3, kind: input, shape index: {}]
  %s4 = inlined_call_operand.vmem [shape: f32[1,64], index: 4, kind: input, shape index: {}]
  %s5 = inlined_call_operand.vmem [shape: f32[64,32], index: 5, kind: input, shape index: {}]
  %s6 = inlined_call_operand.vmem [shape: f32[1,32], index: 6, kind: input, shape index: {}]
  %s7 = inlined_call_operand.vmem [shape: f32[16,32], index: 7, kind: output, shape index: {}]
  %s8 = sld [smem:[#allocation0]]
  $region38: #{transformer_forward.11} parent=0
    _
  %s10 = ssub.s32 1, %s8
  %s11 = scalar_select 0, %s10, %s8
  // Predicated region
  $region2: #{transformer_forward.11} parent=0 // pred_check
    _
  $region3: #{transformer_forward.11} parent=0 // pred_check_branch
    %13 = sbr.rel (0) target = $region5
  $region4: #{transformer_forward.11} parent=0 // pred_region
    _
  $region5: #{transformer_forward.11} parent=0 // pred_fallthru
    _
  // Predicated region
  $region6: #{transformer_forward.11} parent=0 // pred_check
    _
  $region7: #{transformer_forward.11} parent=0 // pred_check_branch
    %15 = sbr.rel (0) target = $region9
  $region8: #{transformer_forward.11} parent=0 // pred_region
    _
  $region9: #{transformer_forward.11} parent=0 // pred_fallthru
    _
  // Predicated region
  $region10: #{transformer_forward.11} parent=0 // pred_check
    _
  $region11: #{transformer_forward.11} parent=0 // pred_check_branch
    %17 = sbr.rel (0) target = $region13
  $region12: #{transformer_forward.11} parent=0 // pred_region
    _
  $region13: #{transformer_forward.11} parent=0 // pred_fallthru
    _
  // Predicated region
  $region14: #{transformer_forward.11} parent=0 // pred_check
    _
  $region15: #{transformer_forward.11} parent=0 // pred_check_branch
    %19 = sbr.rel (0) target = $region17
  $region16: #{transformer_forward.11} parent=0 // pred_region
    _
  $region17: #{transformer_forward.11} parent=0 // pred_fallthru
    _
  // Predicated region
  $region18: #{transformer_forward.11} parent=0 // pred_check
    _
  $region19: #{transformer_forward.11} parent=0 // pred_check_branch
    %21 = sbr.rel (0) target = $region21
  $region20: #{transformer_forward.11} parent=0 // pred_region
    _
  $region21: #{transformer_forward.11} parent=0 // pred_fallthru
    _
  // Predicated region
  $region22: #{transformer_forward.11} parent=0 // pred_check
    _
  $region23: #{transformer_forward.11} parent=0 // pred_check_branch
    %23 = sbr.rel (0) target = $region25
  $region24: #{transformer_forward.11} parent=0 // pred_region
    _
  $region25: #{transformer_forward.11} parent=0 // pred_fallthru
    _
  // Predicated region
  $region26: #{transformer_forward.11} parent=0 // pred_check
    _
  $region27: #{transformer_forward.11} parent=0 // pred_check_branch
    %25 = sbr.rel (0) target = $region29
  $region28: #{transformer_forward.11} parent=0 // pred_region
    _
  $region29: #{transformer_forward.11} parent=0 // pred_fallthru
    _
  %v26 = vld [vmem:[%s0] sm:$0xff]
  %v27 = vld [vmem:[%s0 + $0x8] sm:$0xff]
  %vm28 = vcmask 261120
  %v29 = vsel %vm28, %v26, 0.0
  %30 = vadd.xlane.f32.xlu0 %v29
  %v31 = vpop.xlane.xlu0 %30
  %v32 = vsel %vm28, %v27, 0.0
  %33 = vadd.xlane.f32.xlu0 %v32
  %v34 = vpop.xlane.xlu0 %33
  %v35 = vrcp.pop 32.0
  %v36 = vmul.f32 %v31, %v35
  %v37 = vmul.f32 %v34, %v35
  %v38 = vsub.f32 %v26, %v36
  %v39 = vsub.f32 %v27, %v37
  %v40 = vmul.f32 %v38, %v38
  %v41 = vmul.f32 %v39, %v39
  %v42 = vsel %vm28, %v40, 0.0
  %43 = vadd.xlane.f32.xlu0 %v42
  %v44 = vpop.xlane.xlu0 %43
  %v45 = vsel %vm28, %v41, 0.0
  %46 = vadd.xlane.f32.xlu0 %v45
  %v47 = vpop.xlane.xlu0 %46
  %v48 = vmul.f32 %v44, %v35
  %v49 = vmul.f32 %v47, %v35
  %v50 = vadd.f32 %v48, 1e-05
  %v51 = vadd.f32 %v49, 1e-05
  %v52 = vrsqrt.pop %v50
  %v53 = vrsqrt.pop %v51
  %v54 = vmul.f32 %v38, %v52
  %v55 = vmul.f32 %v39, %v53
  %v56 = vld [vmem:[%s1] sm:$0x1]
  %v58 = vlaneseq
  %v59 = vshrl.u32 %v58, 7
  %v60 = vsub.s32 0, %v59
  %v61 = vrot.slane %v56, %v60
  %v63 = vmul.f32 %v54, %v61
  %v64 = vmul.f32 %v55, %v61
  %v65 = vld [vmem:[%s2] sm:$0x1]
  %v67 = vlaneseq
  %v68 = vshrl.u32 %v67, 7
  %v69 = vsub.s32 0, %v68
  %v70 = vrot.slane %v65, %v69
  %v72 = vadd.f32 %v63, %v70
  %v73 = vadd.f32 %v64, %v70
  %v74 = vld [vmem:[%s3] sm:$0xff]
  %v75 = vld [vmem:[%s3 + $0x8] sm:$0xff]
  %v76 = vld [vmem:[%s3 + $0x10] sm:$0xff]
  %v77 = vld [vmem:[%s3 + $0x18] sm:$0xff]
  %v78 = vld [vmem:[%s4] sm:$0x1]
  %v80 = vlaneseq
  %v81 = vshrl.u32 %v80, 7
  %v82 = vsub.s32 0, %v81
  %v83 = vrot.slane %v78, %v82
  %v86 = vsel %vm28, %v72, 0
  %v89 = vsel %vm28, %v73, 0
  %91 = vmatprep.subr.mxu0 0.0
  %92 = vmatpush1.msra.mxu0 0.0
  %93 = vmatprep.subr.mxu0 0.0
  %94 = vmatpush1.msra.mxu0 0.0
  %95 = vmatprep.subr.mxu0 0.0
  %96 = vmatpush1.msra.mxu0 0.0
  %97 = vmatprep.subr.mxu0 0.0
  %98 = vmatpush1.msra.mxu0 0.0
  %99 = vmatprep.subr.mxu0 0.0
  %100 = vmatpush1.msra.mxu0 0.0
  %101 = vmatprep.subr.mxu0 0.0
  %102 = vmatpush1.msra.mxu0 0.0
  %103 = vmatprep.subr.mxu0 0.0
  %104 = vmatpush1.msra.mxu0 0.0
  %105 = vmatprep.subr.mxu0 0.0
  %106 = vmatpush1.msra.mxu0 0.0
  %107 = vmatprep.subr.mxu0 0.0
  %108 = vmatpush1.msra.mxu0 0.0
  %109 = vmatprep.subr.mxu0 0.0
  %110 = vmatpush1.msra.mxu0 0.0
  %111 = vmatprep.subr.mxu0 0.0
  %112 = vmatpush1.msra.mxu0 0.0
  %113 = vmatprep.subr.mxu0 0.0
  %114 = vmatpush1.msra.mxu0 0.0
  %115 = vmatprep.subr.mxu0 0.0
  %116 = vmatpush1.msra.mxu0 %v77
  %117 = vmatprep.subr.mxu0 0.0
  %118 = vmatpush1.msra.mxu0 %v76
  %119 = vmatprep.subr.mxu0 0.0
  %120 = vmatpush1.msra.mxu0 %v75
  %121 = vmatprep.subr.mxu0 0.0
  %122 = vmatpush1.msra.mxu0 %v74
  %123 = vmatprep.subr.mxu0 0.0
  %124 = vmatpush2.msra.mxu0 0.0
  %125 = vmatprep.subr.mxu0 0.0
  %126 = vmatpush2.msra.mxu0 0.0
  %127 = vmatprep.subr.mxu0 0.0
  %128 = vmatpush2.msra.mxu0 0.0
  %129 = vmatprep.subr.mxu0 0.0
  %130 = vmatpush2.msra.mxu0 0.0
  %131 = vmatprep.subr.mxu0 0.0
  %132 = vmatpush2.msra.mxu0 0.0
  %133 = vmatprep.subr.mxu0 0.0
  %134 = vmatpush2.msra.mxu0 0.0
  %135 = vmatprep.subr.mxu0 0.0
  %136 = vmatpush2.msra.mxu0 0.0
  %137 = vmatprep.subr.mxu0 0.0
  %138 = vmatpush2.msra.mxu0 0.0
  %139 = vmatprep.subr.mxu0 0.0
  %140 = vmatpush2.msra.mxu0 0.0
  %141 = vmatprep.subr.mxu0 0.0
  %142 = vmatpush2.msra.mxu0 0.0
  %143 = vmatprep.subr.mxu0 0.0
  %144 = vmatpush2.msra.mxu0 0.0
  %145 = vmatprep.subr.mxu0 0.0
  %146 = vmatpush2.msra.mxu0 0.0
  %147 = vmatprep.subr.mxu0 0.0
  %148 = vmatpush2.msra.mxu0 0.0
  %149 = vmatprep.subr.mxu0 0.0
  %150 = vmatpush2.msra.mxu0 0.0
  %151 = vmatprep.subr.mxu0 0.0
  %152 = vmatpush2.msra.mxu0 0.0
  %153 = vmatprep.subr.mxu0 0.0
  %154 = vmatpush2.msra.mxu0 0.0
  %155 = vmatprep.mubr.f32.mxu0 0.0
  %156 = vmatmul.mubr.f32.gmra.mxu0 %v86
  %v157 = vpop.f32.mrf.mxu0
  %v158 = vadd.f32 %v83, %v157
  %v159 = vpop.f32.mrf.mxu0
  %160 = vmatprep.mubr.f32.mxu0 0.0
  %161 = vmatmul.mubr.f32.gmra.mxu0 %v89
  %v162 = vpop.f32.mrf.mxu0
  %v163 = vadd.f32 %v83, %v162
  %v164 = vpop.f32.mrf.mxu0
  %165 = vdwg.mxu0
  %v166 = vmul.f32 %v158, 0.5
  %v167 = vmul.f32 %v163, 0.5
  %v168 = vmul.f32 %v158, 0.044715
  %v169 = vmul.f32 %v163, 0.044715
  %v170 = vmul.f32 %v168, %v158
  %v171 = vmul.f32 %v169, %v163
  %v172 = vmul.f32 %v170, %v158
  %v173 = vmul.f32 %v171, %v163
  %v174 = vadd.f32 %v158, %v172
  %v175 = vadd.f32 %v163, %v173
  %v176 = vmul.f32 %v174, 0.7978846
  %v177 = vmul.f32 %v175, 0.7978846
  %v178 = vtanh.pop %v176
  %v179 = vtanh.pop %v177
  %v180 = vadd.f32 %v178, 1.0
  %v181 = vadd.f32 %v179, 1.0
  %v182 = vmul.f32 %v166, %v180
  %v183 = vmul.f32 %v167, %v181
  %v184 = vld [vmem:[%s5] sm:$0xff]
  %v185 = vld [vmem:[%s5 + $0x8] sm:$0xff]
  %v186 = vld [vmem:[%s5 + $0x10] sm:$0xff]
  %v187 = vld [vmem:[%s5 + $0x18] sm:$0xff]
  %v188 = vld [vmem:[%s5 + $0x20] sm:$0xff]
  %v189 = vld [vmem:[%s5 + $0x28] sm:$0xff]
  %v190 = vld [vmem:[%s5 + $0x30] sm:$0xff]
  %v191 = vld [vmem:[%s5 + $0x38] sm:$0xff]
  %v192 = vld [vmem:[%s6] sm:$0x1]
  %v194 = vlaneseq
  %v195 = vshrl.u32 %v194, 7
  %v196 = vsub.s32 0, %v195
  %v197 = vrot.slane %v192, %v196
  %vm199 = vcmask 523264
  %v201 = vsel %vm199, %v182, 0
  %v204 = vsel %vm199, %v183, 0
  %206 = vmatprep.subr.mxu0 0.0
  %207 = vmatpush1.msra.mxu0 0.0
  %208 = vmatprep.subr.mxu0 0.0
  %209 = vmatpush1.msra.mxu0 0.0
  %210 = vmatprep.subr.mxu0 0.0
  %211 = vmatpush1.msra.mxu0 0.0
  %212 = vmatprep.subr.mxu0 0.0
  %213 = vmatpush1.msra.mxu0 0.0
  %214 = vmatprep.subr.mxu0 0.0
  %215 = vmatpush1.msra.mxu0 0.0
  %216 = vmatprep.subr.mxu0 0.0
  %217 = vmatpush1.msra.mxu0 0.0
  %218 = vmatprep.subr.mxu0 0.0
  %219 = vmatpush1.msra.mxu0 0.0
  %220 = vmatprep.subr.mxu0 0.0
  %221 = vmatpush1.msra.mxu0 0.0
  %222 = vmatprep.subr.mxu0 0.0
  %223 = vmatpush1.msra.mxu0 %v191
  %224 = vmatprep.subr.mxu0 0.0
  %225 = vmatpush1.msra.mxu0 %v190
  %226 = vmatprep.subr.mxu0 0.0
  %227 = vmatpush1.msra.mxu0 %v189
  %228 = vmatprep.subr.mxu0 0.0
  %229 = vmatpush1.msra.mxu0 %v188
  %230 = vmatprep.subr.mxu0 0.0
  %231 = vmatpush1.msra.mxu0 %v187
  %232 = vmatprep.subr.mxu0 0.0
  %233 = vmatpush1.msra.mxu0 %v186
  %234 = vmatprep.subr.mxu0 0.0
  %235 = vmatpush1.msra.mxu0 %v185
  %236 = vmatprep.subr.mxu0 0.0
  %237 = vmatpush1.msra.mxu0 %v184
  %238 = vmatprep.subr.mxu0 0.0
  %239 = vmatpush2.msra.mxu0 0.0
  %240 = vmatprep.subr.mxu0 0.0
  %241 = vmatpush2.msra.mxu0 0.0
  %242 = vmatprep.subr.mxu0 0.0
  %243 = vmatpush2.msra.mxu0 0.0
  %244 = vmatprep.subr.mxu0 0.0
  %245 = vmatpush2.msra.mxu0 0.0
  %246 = vmatprep.subr.mxu0 0.0
  %247 = vmatpush2.msra.mxu0 0.0
  %248 = vmatprep.subr.mxu0 0.0
  %249 = vmatpush2.msra.mxu0 0.0
  %250 = vmatprep.subr.mxu0 0.0
  %251 = vmatpush2.msra.mxu0 0.0
  %252 = vmatprep.subr.mxu0 0.0
  %253 = vmatpush2.msra.mxu0 0.0
  %254 = vmatprep.subr.mxu0 0.0
  %255 = vmatpush2.msra.mxu0 0.0
  %256 = vmatprep.subr.mxu0 0.0
  %257 = vmatpush2.msra.mxu0 0.0
  %258 = vmatprep.subr.mxu0 0.0
  %259 = vmatpush2.msra.mxu0 0.0
  %260 = vmatprep.subr.mxu0 0.0
  %261 = vmatpush2.msra.mxu0 0.0
  %262 = vmatprep.subr.mxu0 0.0
  %263 = vmatpush2.msra.mxu0 0.0
  %264 = vmatprep.subr.mxu0 0.0
  %265 = vmatpush2.msra.mxu0 0.0
  %266 = vmatprep.subr.mxu0 0.0
  %267 = vmatpush2.msra.mxu0 0.0
  %268 = vmatprep.subr.mxu0 0.0
  %269 = vmatpush2.msra.mxu0 0.0
  %270 = vmatprep.mubr.f32.mxu0 0.0
  %271 = vmatmul.mubr.f32.gmra.mxu0 %v201
  %v272 = vpop.f32.mrf.mxu0
  %v273 = vadd.f32 %v197, %v272
  %v274 = vpop.f32.mrf.mxu0
  %275 = vmatprep.mubr.f32.mxu0 0.0
  %276 = vmatmul.mubr.f32.gmra.mxu0 %v204
  %v277 = vpop.f32.mrf.mxu0
  %v278 = vadd.f32 %v197, %v277
  %v279 = vpop.f32.mrf.mxu0
  %280 = vdwg.mxu0
  %v281 = vadd.f32 %v273, %v26
  %v282 = vadd.f32 %v278, %v27
  %283 = vst.msk [vmem:[%s7] sm:$0xff] %vm28, %v281
  %284 = vst.msk [vmem:[%s7 + $0x8] sm:$0xff] %vm28, %v282
  // Predicated region
  $region30: #{transformer_forward.11} parent=0 // pred_check
    _
  $region31: #{transformer_forward.11} parent=0 // pred_check_branch
    %286 = sbr.rel (0) target = $region33
  $region32: #{transformer_forward.11} parent=0 // pred_region
    _
  $region33: #{transformer_forward.11} parent=0 // pred_fallthru
    _
  // Predicated region
  $region34: #{transformer_forward.11} parent=0 // pred_check
    _
  $region35: #{transformer_forward.11} parent=0 // pred_check_branch
    %288 = sbr.rel (0) target = $region37
  $region36: #{transformer_forward.11} parent=0 // pred_region
    _
  $region37: #{transformer_forward.11} parent=0 // pred_fallthru
    _

// kernel: transformer_forward.12
$region0: #{transformer_forward.12}
  #allocation0 [shape = 'u32[]', space=smem, size = 0x4, offset = 0x4, fixed_abs, tag = 'smem constant byte address 0x4 - core index']
  #allocation1 [shape = 'u32[144,128]{1,0:T(1,128)}', space=vmem, size = 0x12000, scoped, tag = 'internal scratch']
  %s0 = inlined_call_operand.vmem [shape: f32[16,32], index: 0, kind: input, shape index: {}]
  %s1 = inlined_call_operand.vmem [shape: f32[1,32], index: 1, kind: input, shape index: {}]
  %s2 = inlined_call_operand.vmem [shape: f32[1,32], index: 2, kind: input, shape index: {}]
  %s3 = inlined_call_operand.vmem [shape: f32[32,96], index: 3, kind: input, shape index: {}]
  %s4 = inlined_call_operand.vmem [shape: f32[16,96], index: 4, kind: output, shape index: {}]
  %s5 = sld [smem:[#allocation0]]
  $region26: #{transformer_forward.12} parent=0
    _
  %s7 = ssub.s32 1, %s5
  %s8 = scalar_select 0, %s7, %s5
  // Predicated region
  $region2: #{transformer_forward.12} parent=0 // pred_check
    _
  $region3: #{transformer_forward.12} parent=0 // pred_check_branch
    %10 = sbr.rel (0) target = $region5
  $region4: #{transformer_forward.12} parent=0 // pred_region
    _
  $region5: #{transformer_forward.12} parent=0 // pred_fallthru
    _
  // Predicated region
  $region6: #{transformer_forward.12} parent=0 // pred_check
    _
  $region7: #{transformer_forward.12} parent=0 // pred_check_branch
    %12 = sbr.rel (0) target = $region9
  $region8: #{transformer_forward.12} parent=0 // pred_region
    _
  $region9: #{transformer_forward.12} parent=0 // pred_fallthru
    _
  // Predicated region
  $region10: #{transformer_forward.12} parent=0 // pred_check
    _
  $region11: #{transformer_forward.12} parent=0 // pred_check_branch
    %14 = sbr.rel (0) target = $region13
  $region12: #{transformer_forward.12} parent=0 // pred_region
    _
  $region13: #{transformer_forward.12} parent=0 // pred_fallthru
    _
  // Predicated region
  $region14: #{transformer_forward.12} parent=0 // pred_check
    _
  $region15: #{transformer_forward.12} parent=0 // pred_check_branch
    %16 = sbr.rel (0) target = $region17
  $region16: #{transformer_forward.12} parent=0 // pred_region
    _
  $region17: #{transformer_forward.12} parent=0 // pred_fallthru
    _
  %v17 = vld [vmem:[%s0] sm:$0xff]
  %v18 = vld [vmem:[%s0 + $0x8] sm:$0xff]
  %vm19 = vcmask 261120
  %v20 = vsel %vm19, %v17, 0.0
  %21 = vadd.xlane.f32.xlu0 %v20
  %v22 = vpop.xlane.xlu0 %21
  %v23 = vsel %vm19, %v18, 0.0
  %24 = vadd.xlane.f32.xlu0 %v23
  %v25 = vpop.xlane.xlu0 %24
  %v26 = vrcp.pop 32.0
  %v27 = vmul.f32 %v22, %v26
  %v28 = vmul.f32 %v25, %v26
  %v29 = vsub.f32 %v17, %v27
  %v30 = vsub.f32 %v18, %v28
  %v31 = vmul.f32 %v29, %v29
  %v32 = vmul.f32 %v30, %v30
  %v33 = vsel %vm19, %v31, 0.0
  %34 = vadd.xlane.f32.xlu0 %v33
  %v35 = vpop.xlane.xlu0 %34
  %v36 = vsel %vm19, %v32, 0.0
  %37 = vadd.xlane.f32.xlu0 %v36
  %v38 = vpop.xlane.xlu0 %37
  %v39 = vmul.f32 %v35, %v26
  %v40 = vmul.f32 %v38, %v26
  %v41 = vadd.f32 %v39, 1e-05
  %v42 = vadd.f32 %v40, 1e-05
  %v43 = vrsqrt.pop %v41
  %v44 = vrsqrt.pop %v42
  %v45 = vmul.f32 %v29, %v43
  %v46 = vmul.f32 %v30, %v44
  %v47 = vld [vmem:[%s1] sm:$0x1]
  %v49 = vlaneseq
  %v50 = vshrl.u32 %v49, 7
  %v51 = vsub.s32 0, %v50
  %v52 = vrot.slane %v47, %v51
  %v54 = vmul.f32 %v45, %v52
  %v55 = vmul.f32 %v46, %v52
  %v56 = vld [vmem:[%s2] sm:$0x1]
  %v58 = vlaneseq
  %v59 = vshrl.u32 %v58, 7
  %v60 = vsub.s32 0, %v59
  %v61 = vrot.slane %v56, %v60
  %v63 = vadd.f32 %v54, %v61
  %v64 = vadd.f32 %v55, %v61
  %v65 = vld [vmem:[%s3] sm:$0xff]
  %v66 = vld [vmem:[%s3 + $0x8] sm:$0xff]
  %v67 = vld [vmem:[%s3 + $0x10] sm:$0xff]
  %v68 = vld [vmem:[%s3 + $0x18] sm:$0xff]
  %v70 = vsel %vm19, %v63, 0
  %v73 = vsel %vm19, %v64, 0
  %75 = vmatprep.subr.mxu0 0.0
  %76 = vmatpush1.msra.mxu0 0.0
  %77 = vmatprep.subr.mxu0 0.0
  %78 = vmatpush1.msra.mxu0 0.0
  %79 = vmatprep.subr.mxu0 0.0
  %80 = vmatpush1.msra.mxu0 0.0
  %81 = vmatprep.subr.mxu0 0.0
  %82 = vmatpush1.msra.mxu0 0.0
  %83 = vmatprep.subr.mxu0 0.0
  %84 = vmatpush1.msra.mxu0 0.0
  %85 = vmatprep.subr.mxu0 0.0
  %86 = vmatpush1.msra.mxu0 0.0
  %87 = vmatprep.subr.mxu0 0.0
  %88 = vmatpush1.msra.mxu0 0.0
  %89 = vmatprep.subr.mxu0 0.0
  %90 = vmatpush1.msra.mxu0 0.0
  %91 = vmatprep.subr.mxu0 0.0
  %92 = vmatpush1.msra.mxu0 0.0
  %93 = vmatprep.subr.mxu0 0.0
  %94 = vmatpush1.msra.mxu0 0.0
  %95 = vmatprep.subr.mxu0 0.0
  %96 = vmatpush1.msra.mxu0 0.0
  %97 = vmatprep.subr.mxu0 0.0
  %98 = vmatpush1.msra.mxu0 0.0
  %99 = vmatprep.subr.mxu0 0.0
  %100 = vmatpush1.msra.mxu0 %v68
  %101 = vmatprep.subr.mxu0 0.0
  %102 = vmatpush1.msra.mxu0 %v67
  %103 = vmatprep.subr.mxu0 0.0
  %104 = vmatpush1.msra.mxu0 %v66
  %105 = vmatprep.subr.mxu0 0.0
  %106 = vmatpush1.msra.mxu0 %v65
  %107 = vmatprep.subr.mxu0 0.0
  %108 = vmatpush2.msra.mxu0 0.0
  %109 = vmatprep.subr.mxu0 0.0
  %110 = vmatpush2.msra.mxu0 0.0
  %111 = vmatprep.subr.mxu0 0.0
  %112 = vmatpush2.msra.mxu0 0.0
  %113 = vmatprep.subr.mxu0 0.0
  %114 = vmatpush2.msra.mxu0 0.0
  %115 = vmatprep.subr.mxu0 0.0
  %116 = vmatpush2.msra.mxu0 0.0
  %117 = vmatprep.subr.mxu0 0.0
  %118 = vmatpush2.msra.mxu0 0.0
  %119 = vmatprep.subr.mxu0 0.0
  %120 = vmatpush2.msra.mxu0 0.0
  %121 = vmatprep.subr.mxu0 0.0
  %122 = vmatpush2.msra.mxu0 0.0
  %123 = vmatprep.subr.mxu0 0.0
  %124 = vmatpush2.msra.mxu0 0.0
  %125 = vmatprep.subr.mxu0 0.0
  %126 = vmatpush2.msra.mxu0 0.0
  %127 = vmatprep.subr.mxu0 0.0
  %128 = vmatpush2.msra.mxu0 0.0
  %129 = vmatprep.subr.mxu0 0.0
  %130 = vmatpush2.msra.mxu0 0.0
  %131 = vmatprep.subr.mxu0 0.0
  %132 = vmatpush2.msra.mxu0 0.0
  %133 = vmatprep.subr.mxu0 0.0
  %134 = vmatpush2.msra.mxu0 0.0
  %135 = vmatprep.subr.mxu0 0.0
  %136 = vmatpush2.msra.mxu0 0.0
  %137 = vmatprep.subr.mxu0 0.0
  %138 = vmatpush2.msra.mxu0 0.0
  %139 = vmatprep.mubr.f32.mxu0 0.0
  %140 = vmatmul.mubr.f32.gmra.mxu0 %v70
  %v141 = vpop.f32.mrf.mxu0
  %v142 = vadd.f32 0.0, %v141
  %v143 = vpop.f32.mrf.mxu0
  %144 = vmatprep.mubr.f32.mxu0 0.0
  %145 = vmatmul.mubr.f32.gmra.mxu0 %v73
  %v146 = vpop.f32.mrf.mxu0
  %v147 = vadd.f32 0.0, %v146
  %v148 = vpop.f32.mrf.mxu0
  %149 = vdwg.mxu0
  %vm150 = vcmask 785408
  %151 = vst.msk [vmem:[%s4] sm:$0xff] %vm150, %v142
  %152 = vst.msk [vmem:[%s4 + $0x8] sm:$0xff] %vm150, %v147
  // Predicated region
  $region18: #{transformer_forward.12} parent=0 // pred_check
    _
  $region19: #{transformer_forward.12} parent=0 // pred_check_branch
    %154 = sbr.rel (0) target = $region21
  $region20: #{transformer_forward.12} parent=0 // pred_region
    _
  $region21: #{transformer_forward.12} parent=0 // pred_fallthru
    _
  // Predicated region
  $region22: #{transformer_forward.12} parent=0 // pred_check
    _
  $region23: #{transformer_forward.12} parent=0 // pred_check_branch
    %156 = sbr.rel (0) target = $region25
  $region24: #{transformer_forward.12} parent=0 // pred_region
    _
  $region25: #{transformer_forward.12} parent=0 // pred_fallthru
    _

// kernel: transformer_forward.15
$region0: #{transformer_forward.15}
  #allocation0 [shape = 'u32[]', space=smem, size = 0x4, offset = 0x4, fixed_abs, tag = 'smem constant byte address 0x4 - core index']
  #allocation1 [shape = 'u32[144,128]{1,0:T(1,128)}', space=vmem, size = 0x12000, scoped, tag = 'internal scratch']
  %s0 = inlined_call_operand.vmem [shape: f32[16,32], index: 0, kind: input, shape index: {}]
  %s1 = inlined_call_operand.vmem [shape: f32[1,32], index: 1, kind: input, shape index: {}]
  %s2 = inlined_call_operand.vmem [shape: f32[1,32], index: 2, kind: input, shape index: {}]
  %s3 = inlined_call_operand.vmem [shape: f32[32,64], index: 3, kind: input, shape index: {}]
  %s4 = inlined_call_operand.vmem [shape: f32[1,64], index: 4, kind: input, shape index: {}]
  %s5 = inlined_call_operand.vmem [shape: f32[64,32], index: 5, kind: input, shape index: {}]
  %s6 = inlined_call_operand.vmem [shape: f32[1,32], index: 6, kind: input, shape index: {}]
  %s7 = inlined_call_operand.hbm [shape: f32[16,32], index: 7, kind: output, shape index: {}]
  %s8 = sld [smem:[#allocation0]]
  $region38: #{transformer_forward.15} parent=0
    _
  %s10 = ssub.s32 1, %s8
  %s11 = scalar_select 0, %s10, %s8
  $region1: #{transformer_forward.15} parent=0
    #allocation2 [shape = 'u8[8192]{0}', space=vmem, size = 0x2000, scoped, tag = 'output window, operand 0, single buffered']
    #allocation3 [shape = 's32[1]{0}', space=sflag, size = 0x4, scoped, tag = 'scoped memory for transformer_forward.15']
    %12 = vsyncpa [#allocation3], 0
    // Predicated region
    $region2: #{transformer_forward.15} parent=1 // pred_check
      _
    $region3: #{transformer_forward.15} parent=1 // pred_check_branch
      %14 = sbr.rel (0) target = $region5
    $region4: #{transformer_forward.15} parent=1 // pred_region
      _
    $region5: #{transformer_forward.15} parent=1 // pred_fallthru
      _
    // Predicated region
    $region6: #{transformer_forward.15} parent=1 // pred_check
      _
    $region7: #{transformer_forward.15} parent=1 // pred_check_branch
      %16 = sbr.rel (0) target = $region9
    $region8: #{transformer_forward.15} parent=1 // pred_region
      _
    $region9: #{transformer_forward.15} parent=1 // pred_fallthru
      _
    // Predicated region
    $region10: #{transformer_forward.15} parent=1 // pred_check
      _
    $region11: #{transformer_forward.15} parent=1 // pred_check_branch
      %18 = sbr.rel (0) target = $region13
    $region12: #{transformer_forward.15} parent=1 // pred_region
      _
    $region13: #{transformer_forward.15} parent=1 // pred_fallthru
      _
    // Predicated region
    $region14: #{transformer_forward.15} parent=1 // pred_check
      _
    $region15: #{transformer_forward.15} parent=1 // pred_check_branch
      %20 = sbr.rel (0) target = $region17
    $region16: #{transformer_forward.15} parent=1 // pred_region
      _
    $region17: #{transformer_forward.15} parent=1 // pred_fallthru
      _
    // Predicated region
    $region18: #{transformer_forward.15} parent=1 // pred_check
      _
    $region19: #{transformer_forward.15} parent=1 // pred_check_branch
      %22 = sbr.rel (0) target = $region21
    $region20: #{transformer_forward.15} parent=1 // pred_region
      _
    $region21: #{transformer_forward.15} parent=1 // pred_fallthru
      _
    // Predicated region
    $region22: #{transformer_forward.15} parent=1 // pred_check
      _
    $region23: #{transformer_forward.15} parent=1 // pred_check_branch
      %24 = sbr.rel (0) target = $region25
    $region24: #{transformer_forward.15} parent=1 // pred_region
      _
    $region25: #{transformer_forward.15} parent=1 // pred_fallthru
      _
    // Predicated region
    $region26: #{transformer_forward.15} parent=1 // pred_check
      _
    $region27: #{transformer_forward.15} parent=1 // pred_check_branch
      %26 = sbr.rel (0) target = $region29
    $region28: #{transformer_forward.15} parent=1 // pred_region
      _
    $region29: #{transformer_forward.15} parent=1 // pred_fallthru
      _
    %v27 = vld [vmem:[%s0] sm:$0xff]
    %v28 = vld [vmem:[%s0 + $0x8] sm:$0xff]
    %vm29 = vcmask 261120
    %v30 = vsel %vm29, %v27, 0.0
    %31 = vadd.xlane.f32.xlu0 %v30
    %v32 = vpop.xlane.xlu0 %31
    %v33 = vsel %vm29, %v28, 0.0
    %34 = vadd.xlane.f32.xlu0 %v33
    %v35 = vpop.xlane.xlu0 %34
    %v36 = vrcp.pop 32.0
    %v37 = vmul.f32 %v32, %v36
    %v38 = vmul.f32 %v35, %v36
    %v39 = vsub.f32 %v27, %v37
    %v40 = vsub.f32 %v28, %v38
    %v41 = vmul.f32 %v39, %v39
    %v42 = vmul.f32 %v40, %v40
    %v43 = vsel %vm29, %v41, 0.0
    %44 = vadd.xlane.f32.xlu0 %v43
    %v45 = vpop.xlane.xlu0 %44
    %v46 = vsel %vm29, %v42, 0.0
    %47 = vadd.xlane.f32.xlu0 %v46
    %v48 = vpop.xlane.xlu0 %47
    %v49 = vmul.f32 %v45, %v36
    %v50 = vmul.f32 %v48, %v36
    %v51 = vadd.f32 %v49, 1e-05
    %v52 = vadd.f32 %v50, 1e-05
    %v53 = vrsqrt.pop %v51
    %v54 = vrsqrt.pop %v52
    %v55 = vmul.f32 %v39, %v53
    %v56 = vmul.f32 %v40, %v54
    %v57 = vld [vmem:[%s1] sm:$0x1]
    %v59 = vlaneseq
    %v60 = vshrl.u32 %v59, 7
    %v61 = vsub.s32 0, %v60
    %v62 = vrot.slane %v57, %v61
    %v64 = vmul.f32 %v55, %v62
    %v65 = vmul.f32 %v56, %v62
    %v66 = vld [vmem:[%s2] sm:$0x1]
    %v68 = vlaneseq
    %v69 = vshrl.u32 %v68, 7
    %v70 = vsub.s32 0, %v69
    %v71 = vrot.slane %v66, %v70
    %v73 = vadd.f32 %v64, %v71
    %v74 = vadd.f32 %v65, %v71
    %v75 = vld [vmem:[%s3] sm:$0xff]
    %v76 = vld [vmem:[%s3 + $0x8] sm:$0xff]
    %v77 = vld [vmem:[%s3 + $0x10] sm:$0xff]
    %v78 = vld [vmem:[%s3 + $0x18] sm:$0xff]
    %v79 = vld [vmem:[%s4] sm:$0x1]
    %v81 = vlaneseq
    %v82 = vshrl.u32 %v81, 7
    %v83 = vsub.s32 0, %v82
    %v84 = vrot.slane %v79, %v83
    %v87 = vsel %vm29, %v73, 0
    %v90 = vsel %vm29, %v74, 0
    %92 = vmatprep.subr.mxu0 0.0
    %93 = vmatpush1.msra.mxu0 0.0
    %94 = vmatprep.subr.mxu0 0.0
    %95 = vmatpush1.msra.mxu0 0.0
    %96 = vmatprep.subr.mxu0 0.0
    %97 = vmatpush1.msra.mxu0 0.0
    %98 = vmatprep.subr.mxu0 0.0
    %99 = vmatpush1.msra.mxu0 0.0
    %100 = vmatprep.subr.mxu0 0.0
    %101 = vmatpush1.msra.mxu0 0.0
    %102 = vmatprep.subr.mxu0 0.0
    %103 = vmatpush1.msra.mxu0 0.0
    %104 = vmatprep.subr.mxu0 0.0
    %105 = vmatpush1.msra.mxu0 0.0
    %106 = vmatprep.subr.mxu0 0.0
    %107 = vmatpush1.msra.mxu0 0.0
    %108 = vmatprep.subr.mxu0 0.0
    %109 = vmatpush1.msra.mxu0 0.0
    %110 = vmatprep.subr.mxu0 0.0
    %111 = vmatpush1.msra.mxu0 0.0
    %112 = vmatprep.subr.mxu0 0.0
    %113 = vmatpush1.msra.mxu0 0.0
    %114 = vmatprep.subr.mxu0 0.0
    %115 = vmatpush1.msra.mxu0 0.0
    %116 = vmatprep.subr.mxu0 0.0
    %117 = vmatpush1.msra.mxu0 %v78
    %118 = vmatprep.subr.mxu0 0.0
    %119 = vmatpush1.msra.mxu0 %v77
    %120 = vmatprep.subr.mxu0 0.0
    %121 = vmatpush1.msra.mxu0 %v76
    %122 = vmatprep.subr.mxu0 0.0
    %123 = vmatpush1.msra.mxu0 %v75
    %124 = vmatprep.subr.mxu0 0.0
    %125 = vmatpush2.msra.mxu0 0.0
    %126 = vmatprep.subr.mxu0 0.0
    %127 = vmatpush2.msra.mxu0 0.0
    %128 = vmatprep.subr.mxu0 0.0
    %129 = vmatpush2.msra.mxu0 0.0
    %130 = vmatprep.subr.mxu0 0.0
    %131 = vmatpush2.msra.mxu0 0.0
    %132 = vmatprep.subr.mxu0 0.0
    %133 = vmatpush2.msra.mxu0 0.0
    %134 = vmatprep.subr.mxu0 0.0
    %135 = vmatpush2.msra.mxu0 0.0
    %136 = vmatprep.subr.mxu0 0.0
    %137 = vmatpush2.msra.mxu0 0.0
    %138 = vmatprep.subr.mxu0 0.0
    %139 = vmatpush2.msra.mxu0 0.0
    %140 = vmatprep.subr.mxu0 0.0
    %141 = vmatpush2.msra.mxu0 0.0
    %142 = vmatprep.subr.mxu0 0.0
    %143 = vmatpush2.msra.mxu0 0.0
    %144 = vmatprep.subr.mxu0 0.0
    %145 = vmatpush2.msra.mxu0 0.0
    %146 = vmatprep.subr.mxu0 0.0
    %147 = vmatpush2.msra.mxu0 0.0
    %148 = vmatprep.subr.mxu0 0.0
    %149 = vmatpush2.msra.mxu0 0.0
    %150 = vmatprep.subr.mxu0 0.0
    %151 = vmatpush2.msra.mxu0 0.0
    %152 = vmatprep.subr.mxu0 0.0
    %153 = vmatpush2.msra.mxu0 0.0
    %154 = vmatprep.subr.mxu0 0.0
    %155 = vmatpush2.msra.mxu0 0.0
    %156 = vmatprep.mubr.f32.mxu0 0.0
    %157 = vmatmul.mubr.f32.gmra.mxu0 %v87
    %v158 = vpop.f32.mrf.mxu0
    %v159 = vadd.f32 %v84, %v158
    %v160 = vpop.f32.mrf.mxu0
    %161 = vmatprep.mubr.f32.mxu0 0.0
    %162 = vmatmul.mubr.f32.gmra.mxu0 %v90
    %v163 = vpop.f32.mrf.mxu0
    %v164 = vadd.f32 %v84, %v163
    %v165 = vpop.f32.mrf.mxu0
    %166 = vdwg.mxu0
    %v167 = vmul.f32 %v159, 0.5
    %v168 = vmul.f32 %v164, 0.5
    %v169 = vmul.f32 %v159, 0.044715
    %v170 = vmul.f32 %v164, 0.044715
    %v171 = vmul.f32 %v169, %v159
    %v172 = vmul.f32 %v170, %v164
    %v173 = vmul.f32 %v171, %v159
    %v174 = vmul.f32 %v172, %v164
    %v175 = vadd.f32 %v159, %v173
    %v176 = vadd.f32 %v164, %v174
    %v177 = vmul.f32 %v175, 0.7978846
    %v178 = vmul.f32 %v176, 0.7978846
    %v179 = vtanh.pop %v177
    %v180 = vtanh.pop %v178
    %v181 = vadd.f32 %v179, 1.0
    %v182 = vadd.f32 %v180, 1.0
    %v183 = vmul.f32 %v167, %v181
    %v184 = vmul.f32 %v168, %v182
    %v185 = vld [vmem:[%s5] sm:$0xff]
    %v186 = vld [vmem:[%s5 + $0x8] sm:$0xff]
    %v187 = vld [vmem:[%s5 + $0x10] sm:$0xff]
    %v188 = vld [vmem:[%s5 + $0x18] sm:$0xff]
    %v189 = vld [vmem:[%s5 + $0x20] sm:$0xff]
    %v190 = vld [vmem:[%s5 + $0x28] sm:$0xff]
    %v191 = vld [vmem:[%s5 + $0x30] sm:$0xff]
    %v192 = vld [vmem:[%s5 + $0x38] sm:$0xff]
    %v193 = vld [vmem:[%s6] sm:$0x1]
    %v195 = vlaneseq
    %v196 = vshrl.u32 %v195, 7
    %v197 = vsub.s32 0, %v196
    %v198 = vrot.slane %v193, %v197
    %vm200 = vcmask 523264
    %v202 = vsel %vm200, %v183, 0
    %v205 = vsel %vm200, %v184, 0
    %207 = vmatprep.subr.mxu0 0.0
    %208 = vmatpush1.msra.mxu0 0.0
    %209 = vmatprep.subr.mxu0 0.0
    %210 = vmatpush1.msra.mxu0 0.0
    %211 = vmatprep.subr.mxu0 0.0
    %212 = vmatpush1.msra.mxu0 0.0
    %213 = vmatprep.subr.mxu0 0.0
    %214 = vmatpush1.msra.mxu0 0.0
    %215 = vmatprep.subr.mxu0 0.0
    %216 = vmatpush1.msra.mxu0 0.0
    %217 = vmatprep.subr.mxu0 0.0
    %218 = vmatpush1.msra.mxu0 0.0
    %219 = vmatprep.subr.mxu0 0.0
    %220 = vmatpush1.msra.mxu0 0.0
    %221 = vmatprep.subr.mxu0 0.0
    %222 = vmatpush1.msra.mxu0 0.0
    %223 = vmatprep.subr.mxu0 0.0
    %224 = vmatpush1.msra.mxu0 %v192
    %225 = vmatprep.subr.mxu0 0.0
    %226 = vmatpush1.msra.mxu0 %v191
    %227 = vmatprep.subr.mxu0 0.0
    %228 = vmatpush1.msra.mxu0 %v190
    %229 = vmatprep.subr.mxu0 0.0
    %230 = vmatpush1.msra.mxu0 %v189
    %231 = vmatprep.subr.mxu0 0.0
    %232 = vmatpush1.msra.mxu0 %v188
    %233 = vmatprep.subr.mxu0 0.0
    %234 = vmatpush1.msra.mxu0 %v187
    %235 = vmatprep.subr.mxu0 0.0
    %236 = vmatpush1.msra.mxu0 %v186
    %237 = vmatprep.subr.mxu0 0.0
    %238 = vmatpush1.msra.mxu0 %v185
    %239 = vmatprep.subr.mxu0 0.0
    %240 = vmatpush2.msra.mxu0 0.0
    %241 = vmatprep.subr.mxu0 0.0
    %242 = vmatpush2.msra.mxu0 0.0
    %243 = vmatprep.subr.mxu0 0.0
    %244 = vmatpush2.msra.mxu0 0.0
    %245 = vmatprep.subr.mxu0 0.0
    %246 = vmatpush2.msra.mxu0 0.0
    %247 = vmatprep.subr.mxu0 0.0
    %248 = vmatpush2.msra.mxu0 0.0
    %249 = vmatprep.subr.mxu0 0.0
    %250 = vmatpush2.msra.mxu0 0.0
    %251 = vmatprep.subr.mxu0 0.0
    %252 = vmatpush2.msra.mxu0 0.0
    %253 = vmatprep.subr.mxu0 0.0
    %254 = vmatpush2.msra.mxu0 0.0
    %255 = vmatprep.subr.mxu0 0.0
    %256 = vmatpush2.msra.mxu0 0.0
    %257 = vmatprep.subr.mxu0 0.0
    %258 = vmatpush2.msra.mxu0 0.0
    %259 = vmatprep.subr.mxu0 0.0
    %260 = vmatpush2.msra.mxu0 0.0
    %261 = vmatprep.subr.mxu0 0.0
    %262 = vmatpush2.msra.mxu0 0.0
    %263 = vmatprep.subr.mxu0 0.0
    %264 = vmatpush2.msra.mxu0 0.0
    %265 = vmatprep.subr.mxu0 0.0
    %266 = vmatpush2.msra.mxu0 0.0
    %267 = vmatprep.subr.mxu0 0.0
    %268 = vmatpush2.msra.mxu0 0.0
    %269 = vmatprep.subr.mxu0 0.0
    %270 = vmatpush2.msra.mxu0 0.0
    %271 = vmatprep.mubr.f32.mxu0 0.0
    %272 = vmatmul.mubr.f32.gmra.mxu0 %v202
    %v273 = vpop.f32.mrf.mxu0
    %v274 = vadd.f32 %v198, %v273
    %v275 = vpop.f32.mrf.mxu0
    %276 = vmatprep.mubr.f32.mxu0 0.0
    %277 = vmatmul.mubr.f32.gmra.mxu0 %v205
    %v278 = vpop.f32.mrf.mxu0
    %v279 = vadd.f32 %v198, %v278
    %v280 = vpop.f32.mrf.mxu0
    %281 = vdwg.mxu0
    %v282 = vadd.f32 %v274, %v27
    %v283 = vadd.f32 %v279, %v28
    %284 = vst.msk [vmem:[#allocation2] sm:$0xff] %vm29, %v282
    %285 = vst.msk [vmem:[#allocation2 + $0x8] sm:$0xff] %vm29, %v283
    // Predicated region
    $region30: #{transformer_forward.15} parent=1 // pred_check
      _
    $region31: #{transformer_forward.15} parent=1 // pred_check_branch
      %287 = sbr.rel (0) target = $region33
    $region32: #{transformer_forward.15} parent=1 // pred_region
      %s289 = ssub.s32 256, 256
      %290 = vsyncadd [#allocation3], %s289
      %s291 = sshll.u32 [#allocation2], 4
      %s292 = int_to_ptr.vmem [resolvable:$true] %s291
      %297 = dma.vmem_to_hbm [thread:$0]  %s292, 256, %s7, [#allocation3], 128, 128, 8
    $region33: #{transformer_forward.15} parent=1 // pred_fallthru
      _
    // Predicated region
    $region34: #{transformer_forward.15} parent=1 // pred_check
      _
    $region35: #{transformer_forward.15} parent=1 // pred_check_branch
      %299 = sbr.rel (0) target = $region37
    $region36: #{transformer_forward.15} parent=1 // pred_region
      %300 = dma.done [#allocation3], 256
    $region37: #{transformer_forward.15} parent=1 // pred_fallthru
      _
    %301 = vsyncpa [#allocation3], 1

</llo_original>
